<compile_context>
chip_gen: v6e
topology: v6e:2x2x1
jax: 0.10.0
libtpu: 0.0.40
codegen_flags: <defaults>
</compile_context>

<pallas_src>
import functools

import jax
import jax.numpy as jnp
from jax import lax
from jax.experimental import pallas as pl
from jax.experimental.pallas import tpu as pltpu

_NEG_HUGE = -1e30  # fill for padded class columns; exp underflows to exactly 0


def _round_up(x, m):
    return (x + m - 1) // m * m


def _ce_kl_pwkl_kernel(n_real, c_real, mm_dtype, ce_in_tile,
                       logits_ref, tgt_ref, logcent_ref, out_ref,
                       segp_ref, seglp_ref, kl_ref, snent_ref, ce_ref):
    i = pl.program_id(0)

    @pl.when(i == 0)
    def _init():
        segp_ref[...] = jnp.zeros_like(segp_ref)
        seglp_ref[...] = jnp.zeros_like(seglp_ref)
        kl_ref[...] = jnp.zeros_like(kl_ref)
        snent_ref[...] = jnp.zeros_like(snent_ref)
        ce_ref[...] = jnp.zeros_like(ce_ref)

    x = logits_ref[...].astype(jnp.float32)          # [T, Cp] logits tile
    tgt = tgt_ref[...]                               # [T, 1]  int32 labels
    logcent = logcent_ref[...].astype(jnp.float32)   # [T, Cp] log-centroids
    t_rows, c_pad = x.shape
    cols_padded = c_real != c_pad

    col = lax.broadcasted_iota(jnp.int32, (t_rows, c_pad), 1)
    row = lax.broadcasted_iota(jnp.int32, (t_rows, 1), 0) + i * t_rows
    row_valid = row < n_real

    # ---- softmax / log-softmax: exp once, reciprocal only on [T,1] ----
    if cols_padded:
        col_valid = col < c_real
        x = jnp.where(col_valid, x, _NEG_HUGE)
    m = jnp.max(x, axis=1, keepdims=True)
    sh = x - m
    es = jnp.exp(sh)                                 # exactly 0 at padded columns
    denom = jnp.sum(es, axis=1, keepdims=True)
    p = es * pl.reciprocal(denom)                    # softmax
    logp = sh - jnp.log(denom)
    if cols_padded:
        logp = jnp.where(col_valid, logp, 0.0)       # keep pad columns exactly 0

    # one-hot(labels); padded rows zeroed so every label-segmented accumulator
    # automatically excludes them.
    onehot = ((col == tgt) & row_valid).astype(jnp.float32)   # [T, Cp]

    # KL lane partials: sum_i p_i . log(cent_i).  (The sum_i p_i . logp_i half
    # is recovered from snent at finalize.)  Padded rows/cols contribute exactly
    # 0 because log-centroids are padded with log(1)=0 and p is 0 at pad cols.
    kl_ref[...] += jnp.sum(p * logcent, axis=0, keepdims=True)

    nent = jnp.sum(p * logp, axis=1, keepdims=True)            # [T, 1]
    snent_ref[...] += jnp.sum(onehot * nent, axis=0, keepdims=True)

    if ce_in_tile:
        # only used in the bf16-matmul regime so CE keeps full f32 accuracy
        ce_ref[...] += jnp.sum(onehot * logp, axis=0, keepdims=True)

    # per-label segment sums, transposed orientation [class-col c, label k]:
    #   segp[c,k]  = sum_{i: lbl_i=k} p[i,c]
    #   seglp[c,k] = sum_{i: lbl_i=k} logp[i,c]
    dnums = (((0,), (0,)), ((), ()))
    oh_mm = onehot.astype(mm_dtype)
    segp_ref[...] += lax.dot_general(p.astype(mm_dtype), oh_mm, dnums,
                                     preferred_element_type=jnp.float32)
    seglp_ref[...] += lax.dot_general(logp.astype(mm_dtype), oh_mm, dnums,
                                      preferred_element_type=jnp.float32)

    @pl.when(i == pl.num_programs(0) - 1)
    def _finalize():
        n_f = jnp.float32(n_real)
        segp = segp_ref[...]
        seglp = seglp_ref[...]
        snent = snent_ref[...]
        total_nent = jnp.sum(snent)          # sum_i p_i . logp_i over valid rows

        # loss[1]: batchmean KL = (1/N) sum_i p_i . (logp_i - log cent_i)
        out_ref[1] = (total_nent - jnp.sum(kl_ref[...])) / n_f

        # loss[0]: CE = -(1/N) sum_i logp[i, tgt_i] = -(1/N) trace(seglp)
        if ce_in_tile:
            ce = jnp.sum(ce_ref[...])
        else:
            r_idx = lax.broadcasted_iota(jnp.int32, seglp.shape, 0)
            c_idx = lax.broadcasted_iota(jnp.int32, seglp.shape, 1)
            ce = jnp.sum(jnp.where(r_idx == c_idx, seglp, 0.0))
        out_ref[0] = -ce / n_f

        # loss[2]: (1/N^2) sum_{lbl_i != lbl_j} (nent_i - p_i . logp_j)
        cnt = jnp.sum(segp, axis=0, keepdims=True)      # [1,Cp] per-label counts
        a_term = n_f * total_nent - jnp.sum(cnt * snent)
        gp = jnp.sum(segp, axis=1, keepdims=True)       # [Cp,1] sum_i p_i
        gl = jnp.sum(seglp, axis=1, keepdims=True)      # [Cp,1] sum_j logp_j
        b_term = jnp.sum(gp * gl) - jnp.sum(segp * seglp)
        out_ref[2] = (a_term - b_term) / (n_f * n_f)


def ce_kl_pwkl_loss(output, target, centroids, eps=0.0, block_rows=None,
                    mxu_bf16=None):
    """output: [N, C] logits; target: [N] int labels; centroids: [N, C] probs.

    Returns float32 [3] = (CE, batchmean KL, pairwise KL). `eps` is accepted
    but unused, matching the PyTorch forward (which never reads it)."""
    del eps
    N, C = output.shape
    c_pad = _round_up(C, 128)                       # lane-dense class dim

    # The two [Cp,Cp] f32 segment accumulators must fit on-chip together with
    # the pipelined input tiles (v7x has only 64 MiB physical VMEM per core).
    if 2 * c_pad * c_pad * 4 > (48 << 20):
        # TODO(synk): chunk the class dimension of the segment accumulators
        # (extra grid axis / HBM spill) to support > ~2.4k classes.
        raise ValueError(f"n_classes={C} too large for on-chip segment "
                         "accumulators (c_pad must be <= 2432)")

    if mxu_bf16 is None:
        # bf16 segment matmuls only where the MXU is the likely bottleneck;
        # costs ~2^-8 relative rounding on the pairwise term (CE stays f32).
        mxu_bf16 = c_pad >= 1024
    mm_dtype = jnp.bfloat16 if mxu_bf16 else jnp.float32

    logit_isz = output.dtype.itemsize
    cent_isz = centroids.dtype.itemsize
    # sublane multiple for the narrowest streamed dtype (f32 -> 8, bf16 -> 16)
    row_mult = max(8, 32 // min(logit_isz, cent_isz, 4))

    if block_rows is None:
        # Big row tiles (>=~512) amortize the ~0.35us per-grid-step overhead and
        # reach ~85% of HBM roofline; budget what is left of ~40 MiB of VMEM
        # after the segment accumulators across (2 inputs x 2 pipeline buffers
        # + ~8 f32 in-kernel temporaries) ~= 48 bytes per (row, class) element.
        avail = max(4 << 20, (40 << 20) - 2 * c_pad * c_pad * 4)
        block_rows = min(1024, max(row_mult, avail // (48 * c_pad)),
                         _round_up(N, row_mult))
    block_rows = max(row_mult, _round_up(block_rows, row_mult))
    n_pad = _round_up(N, block_rows)
    grid = (n_pad // block_rows,)

    # Inputs stay in their native dtype (the kernel upcasts per tile); the pads
    # and the centroid log are cheap elementwise producers that XLA may fuse
    # into the pallas_call operands (allow_input_fusion) instead of writing new
    # HBM arrays.  Pad value for log-centroids is 0 == log(1).
    logits_p = jnp.pad(output, ((0, n_pad - N), (0, c_pad - C)))
    logcent_p = jnp.pad(jnp.log(centroids), ((0, n_pad - N), (0, c_pad - C)))
    tgt_p = jnp.pad(target.astype(jnp.int32), (0, n_pad - N)).reshape(n_pad, 1)

    # Explicit scoped-VMEM budget: the defaults (v5e 16 MiB, v6e/v7x 32 MiB) are
    # too small once the [Cp,Cp] accumulators and large row tiles are in play.
    vmem_bytes = (
        2 * block_rows * c_pad * logit_isz      # logits tile, double-buffered
        + 2 * block_rows * c_pad * cent_isz     # log-centroid tile, double-buffered
        + 2 * block_rows * 128 * 4              # label tile (lane-padded), x2
        + 2 * c_pad * c_pad * 4                 # segp / seglp accumulators
        + 3 * 8 * c_pad * 4                     # kl / snent / ce lane accumulators
        + 8 * block_rows * c_pad * 4            # in-kernel f32 temporaries
        + 3 * c_pad * c_pad * 4                 # finalize temporaries
    )
    vmem_limit = min(max(int(vmem_bytes * 1.25) + (1 << 20), 32 << 20), 128 << 20)

    cost = pl.CostEstimate(
        flops=4 * n_pad * c_pad * c_pad + 16 * n_pad * c_pad,
        transcendentals=n_pad * c_pad + 3 * n_pad,
        bytes_accessed=n_pad * c_pad * (logit_isz + cent_isz) + n_pad * 4 + 3 * 4,
    )

    kernel = functools.partial(_ce_kl_pwkl_kernel, N, C, mm_dtype, mxu_bf16)
    return pl.pallas_call(
        kernel,
        out_shape=jax.ShapeDtypeStruct((3,), jnp.float32),
        grid_spec=pltpu.PrefetchScalarGridSpec(
            num_scalar_prefetch=0,
            grid=grid,
            in_specs=[
                pl.BlockSpec((block_rows, c_pad), lambda i: (i, 0)),
                pl.BlockSpec((block_rows, 1), lambda i: (i, 0)),
                pl.BlockSpec((block_rows, c_pad), lambda i: (i, 0)),
            ],
            out_specs=pl.BlockSpec((3,), lambda i: (0,),
                                   memory_space=pltpu.MemorySpace.SMEM),
            scratch_shapes=[
                pltpu.VMEM((c_pad, c_pad), jnp.float32),  # segp[c,k]
                pltpu.VMEM((c_pad, c_pad), jnp.float32),  # seglp[c,k]
                pltpu.VMEM((1, c_pad), jnp.float32),      # KL lane partials
                pltpu.VMEM((1, c_pad), jnp.float32),      # per-label sum of nent
                pltpu.VMEM((1, c_pad), jnp.float32),      # CE lane partials (bf16 mode)
            ],
        ),
        compiler_params=pltpu.CompilerParams(
            dimension_semantics=("arbitrary",),
            vmem_limit_bytes=vmem_limit,
            allow_input_fusion=[True, True, True],
        ),
        cost_estimate=cost,
    )(logits_p, tgt_p, logcent_p)


def _reference(output, target, centroids):
    # plain-JAX reference mirroring the PyTorch module
    N, C = output.shape
    logp = jax.nn.log_softmax(output.astype(jnp.float32), axis=1)
    p = jnp.exp(logp)
    ce = -jnp.mean(logp[jnp.arange(N), target])
    kl = jnp.sum(p * (logp - jnp.log(centroids.astype(jnp.float32)))) / N
    nent = jnp.sum(p * logp, axis=1, keepdims=True)
    cross = p @ logp.T
    mask_neg = (target[:, None] != target[None, :]).astype(jnp.float32)
    pw = jnp.mean(mask_neg * (nent - cross))
    return jnp.stack([ce, kl, pw]).astype(jnp.float32)


if __name__ == "__main__":
    key = jax.random.PRNGKey(0)
    k1, k2, k3, k4, k5, k6 = jax.random.split(key, 6)

    # Small shapes: exercise row padding, column padding, and a 3-step grid
    # (init / accumulate / finalize) via an explicit tiny row tile.
    N, C = 20, 10
    logits = jax.random.normal(k1, (N, C), dtype=jnp.float32)
    target = jax.random.randint(k2, (N,), 0, C, dtype=jnp.int32)
    centroids = jax.nn.softmax(jax.random.normal(k3, (N, C), dtype=jnp.float32),
                               axis=1)

    out = ce_kl_pwkl_loss(logits, target, centroids, eps=1e-8, block_rows=8)
    out = jax.block_until_ready(out)
    ref = _reference(logits, target, centroids)
    assert out.shape == (3,)
    assert jnp.allclose(out, ref, atol=1e-4, rtol=1e-4), (out, ref)

    # Larger shape with the default (VMEM-budget-driven) row tile, under jit.
    N2, C2 = 2560, 130
    logits2 = jax.random.normal(k4, (N2, C2), dtype=jnp.float32)
    target2 = jax.random.randint(k5, (N2,), 0, C2, dtype=jnp.int32)
    centroids2 = jax.nn.softmax(
        jax.random.normal(k6, (N2, C2), dtype=jnp.float32), axis=1)

    out2 = jax.jit(lambda a, b, c: ce_kl_pwkl_loss(a, b, c, eps=1e-8))(
        logits2, target2, centroids2)
    out2 = jax.block_until_ready(out2)
    ref2 = _reference(logits2, target2, centroids2)
    assert jnp.allclose(out2, ref2, atol=1e-3, rtol=1e-3), (out2, ref2)

    print("KERNEL_OK")
</pallas_src>

<mosaic_0001>
module attributes {stable_mosaic.version = 11 : i64} {
  func.func @_ce_kl_pwkl_kernel(%arg0: i32, %arg1: memref<8x128xf32, #tpu.memory_space<vmem>>, %arg2: memref<8x1xi32, #tpu.memory_space<vmem>>, %arg3: memref<8x128xf32, #tpu.memory_space<vmem>>, %arg4: memref<3xf32, #tpu.memory_space<smem>>, %arg5: memref<128x128xf32, #tpu.memory_space<vmem>>, %arg6: memref<128x128xf32, #tpu.memory_space<vmem>>, %arg7: memref<1x128xf32, #tpu.memory_space<vmem>>, %arg8: memref<1x128xf32, #tpu.memory_space<vmem>>, %arg9: memref<1x128xf32, #tpu.memory_space<vmem>>) attributes {dimension_semantics = [#tpu.dimension_semantics<arbitrary>], iteration_bounds = array<i64: 3>, scalar_prefetch = 0 : i64, scratch_operands = 5 : i64, tpu.core_type = #tpu.core_type<tc>, window_params = [{transform_indices = @transform_0, window_bounds = array<i64: 8, 128>}, {transform_indices = @transform_1, window_bounds = array<i64: 8, 1>}, {transform_indices = @transform_2, window_bounds = array<i64: 8, 128>}, {transform_indices = @transform_3, window_bounds = array<i64: 3>}]} {
    %c0_i32 = arith.constant 0 : i32
    %0 = arith.cmpi eq, %arg0, %c0_i32 : i32
    %1 = arith.extui %0 : i1 to i32
    %c0_i32_0 = arith.constant 0 : i32
    %2 = arith.cmpi ne, %1, %c0_i32_0 : i32
    scf.if %2 {
      %cst_31 = arith.constant 0.000000e+00 : f32
      %65 = vector.broadcast %cst_31 : f32 to vector<128x128xf32>
      %c0_32 = arith.constant 0 : index
      %c0_33 = arith.constant 0 : index
      %66 = vector.load %arg5[%c0_32, %c0_33] : memref<128x128xf32, #tpu.memory_space<vmem>>, vector<128x128xf32>
      tpu.vector_store %arg5[%c0_32, %c0_33], %65 {strides = array<i32>} : memref<128x128xf32, #tpu.memory_space<vmem>>, vector<128x128xf32>,
      %cst_34 = arith.constant 0.000000e+00 : f32
      %67 = vector.broadcast %cst_34 : f32 to vector<128x128xf32>
      %c0_35 = arith.constant 0 : index
      %c0_36 = arith.constant 0 : index
      %68 = vector.load %arg6[%c0_35, %c0_36] : memref<128x128xf32, #tpu.memory_space<vmem>>, vector<128x128xf32>
      tpu.vector_store %arg6[%c0_35, %c0_36], %67 {strides = array<i32>} : memref<128x128xf32, #tpu.memory_space<vmem>>, vector<128x128xf32>,
      %cst_37 = arith.constant 0.000000e+00 : f32
      %69 = vector.broadcast %cst_37 : f32 to vector<1x128xf32>
      %c0_38 = arith.constant 0 : index
      %c0_39 = arith.constant 0 : index
      %70 = vector.load %arg7[%c0_38, %c0_39] : memref<1x128xf32, #tpu.memory_space<vmem>>, vector<1x128xf32>
      tpu.vector_store %arg7[%c0_38, %c0_39], %69 {strides = array<i32>} : memref<1x128xf32, #tpu.memory_space<vmem>>, vector<1x128xf32>,
      %cst_40 = arith.constant 0.000000e+00 : f32
      %71 = vector.broadcast %cst_40 : f32 to vector<1x128xf32>
      %c0_41 = arith.constant 0 : index
      %c0_42 = arith.constant 0 : index
      %72 = vector.load %arg8[%c0_41, %c0_42] : memref<1x128xf32, #tpu.memory_space<vmem>>, vector<1x128xf32>
      tpu.vector_store %arg8[%c0_41, %c0_42], %71 {strides = array<i32>} : memref<1x128xf32, #tpu.memory_space<vmem>>, vector<1x128xf32>,
      %cst_43 = arith.constant 0.000000e+00 : f32
      %73 = vector.broadcast %cst_43 : f32 to vector<1x128xf32>
      %c0_44 = arith.constant 0 : index
      %c0_45 = arith.constant 0 : index
      %74 = vector.load %arg9[%c0_44, %c0_45] : memref<1x128xf32, #tpu.memory_space<vmem>>, vector<1x128xf32>
      tpu.vector_store %arg9[%c0_44, %c0_45], %73 {strides = array<i32>} : memref<1x128xf32, #tpu.memory_space<vmem>>, vector<1x128xf32>,
    } else {
    }
    %c0 = arith.constant 0 : index
    %c0_1 = arith.constant 0 : index
    %3 = vector.load %arg1[%c0, %c0_1] : memref<8x128xf32, #tpu.memory_space<vmem>>, vector<8x128xf32>
    %c0_2 = arith.constant 0 : index
    %c0_3 = arith.constant 0 : index
    %4 = vector.load %arg2[%c0_2, %c0_3] : memref<8x1xi32, #tpu.memory_space<vmem>>, vector<8x1xi32>
    %c0_4 = arith.constant 0 : index
    %c0_5 = arith.constant 0 : index
    %5 = vector.load %arg3[%c0_4, %c0_5] : memref<8x128xf32, #tpu.memory_space<vmem>>, vector<8x128xf32>
    %6 = tpu.iota {dimensions = array<i32: 1>} : vector<8x128xi32>
    %7 = tpu.iota {dimensions = array<i32: 0>} : vector<8x1xi32>
    %c8_i32 = arith.constant 8 : i32
    %8 = arith.muli %arg0, %c8_i32 : i32
    %9 = vector.broadcast %8 : i32 to vector<8x1xi32>
    %10 = arith.addi %7, %9 : vector<8x1xi32>
    %c20_i32 = arith.constant 20 : i32
    %11 = vector.broadcast %c20_i32 : i32 to vector<8x1xi32>
    %12 = arith.cmpi slt, %10, %11 : vector<8x1xi32>
    %c10_i32 = arith.constant 10 : i32
    %13 = vector.broadcast %c10_i32 : i32 to vector<8x128xi32>
    %14 = arith.cmpi slt, %6, %13 : vector<8x128xi32>
    %cst = arith.constant -1.000000e+30 : f32
    %15 = vector.broadcast %cst : f32 to vector<8x128xf32>
    %16 = arith.select %14, %3, %15 : vector<8x128xi1>, vector<8x128xf32>
    %cst_6 = arith.constant dense<0xFF800000> : vector<8xf32>
    %17 = vector.multi_reduction <maximumf>, %16, %cst_6 [1] : vector<8x128xf32> to vector<8xf32>
    %18 = vector.shape_cast %17 : vector<8xf32> to vector<8x1xf32>
    %19 = vector.broadcast %18 : vector<8x1xf32> to vector<8x128xf32>
    %20 = arith.subf %16, %19 : vector<8x128xf32>
    %21 = math.exp %20 : vector<8x128xf32>
    %cst_7 = arith.constant dense<0.000000e+00> : vector<8xf32>
    %22 = vector.multi_reduction <add>, %21, %cst_7 [1] : vector<8x128xf32> to vector<8xf32>
    %23 = vector.shape_cast %22 : vector<8xf32> to vector<8x1xf32>
    %24 = tpu.reciprocal %23 : vector<8x1xf32> -> vector<8x1xf32>
    %25 = vector.broadcast %24 : vector<8x1xf32> to vector<8x128xf32>
    %26 = arith.mulf %21, %25 : vector<8x128xf32>
    %27 = math.log %23 : vector<8x1xf32>
    %28 = vector.broadcast %27 : vector<8x1xf32> to vector<8x128xf32>
    %29 = arith.subf %20, %28 : vector<8x128xf32>
    %cst_8 = arith.constant 0.000000e+00 : f32
    %30 = vector.broadcast %cst_8 : f32 to vector<8x128xf32>
    %31 = arith.select %14, %29, %30 : vector<8x128xi1>, vector<8x128xf32>
    %32 = vector.broadcast %4 : vector<8x1xi32> to vector<8x128xi32>
    %33 = arith.cmpi eq, %6, %32 : vector<8x128xi32>
    %34 = vector.broadcast %12 : vector<8x1xi1> to vector<8x128xi1>
    %35 = arith.andi %33, %34 : vector<8x128xi1>
    %36 = arith.extui %35 : vector<8x128xi1> to vector<8x128xi32>
    %37 = arith.sitofp %36 : vector<8x128xi32> to vector<8x128xf32>
    %c0_9 = arith.constant 0 : index
    %c0_10 = arith.constant 0 : index
    %38 = vector.load %arg7[%c0_9, %c0_10] : memref<1x128xf32, #tpu.memory_space<vmem>>, vector<1x128xf32>
    %39 = arith.mulf %26, %5 : vector<8x128xf32>
    %cst_11 = arith.constant dense<0.000000e+00> : vector<128xf32>
    %40 = vector.multi_reduction <add>, %39, %cst_11 [0] : vector<8x128xf32> to vector<128xf32>
    %41 = vector.shape_cast %40 : vector<128xf32> to vector<1x128xf32>
    %42 = arith.addf %38, %41 : vector<1x128xf32>
    %c0_12 = arith.constant 0 : index
    %c0_13 = arith.constant 0 : index
    %43 = vector.load %arg7[%c0_12, %c0_13] : memref<1x128xf32, #tpu.memory_space<vmem>>, vector<1x128xf32>
    tpu.vector_store %arg7[%c0_12, %c0_13], %42 {strides = array<i32>} : memref<1x128xf32, #tpu.memory_space<vmem>>, vector<1x128xf32>,
    %44 = arith.mulf %26, %31 : vector<8x128xf32>
    %cst_14 = arith.constant dense<0.000000e+00> : vector<8xf32>
    %45 = vector.multi_reduction <add>, %44, %cst_14 [1] : vector<8x128xf32> to vector<8xf32>
    %46 = vector.shape_cast %45 : vector<8xf32> to vector<8x1xf32>
    %c0_15 = arith.constant 0 : index
    %c0_16 = arith.constant 0 : index
    %47 = vector.load %arg8[%c0_15, %c0_16] : memref<1x128xf32, #tpu.memory_space<vmem>>, vector<1x128xf32>
    %48 = vector.broadcast %46 : vector<8x1xf32> to vector<8x128xf32>
    %49 = arith.mulf %37, %48 : vector<8x128xf32>
    %cst_17 = arith.constant dense<0.000000e+00> : vector<128xf32>
    %50 = vector.multi_reduction <add>, %49, %cst_17 [0] : vector<8x128xf32> to vector<128xf32>
    %51 = vector.shape_cast %50 : vector<128xf32> to vector<1x128xf32>
    %52 = arith.addf %47, %51 : vector<1x128xf32>
    %c0_18 = arith.constant 0 : index
    %c0_19 = arith.constant 0 : index
    %53 = vector.load %arg8[%c0_18, %c0_19] : memref<1x128xf32, #tpu.memory_space<vmem>>, vector<1x128xf32>
    tpu.vector_store %arg8[%c0_18, %c0_19], %52 {strides = array<i32>} : memref<1x128xf32, #tpu.memory_space<vmem>>, vector<1x128xf32>,
    %c0_20 = arith.constant 0 : index
    %c0_21 = arith.constant 0 : index
    %54 = vector.load %arg5[%c0_20, %c0_21] : memref<128x128xf32, #tpu.memory_space<vmem>>, vector<128x128xf32>
    %cst_22 = arith.constant dense<0.000000e+00> : vector<128x128xf32>
    %55 = tpu.matmul %26, %37, %cst_22 {dimension_numbers = #tpu.dot_dimension_numbers<[0], [0], [1], [1], [0, 1, 1, 1], [], []>} : vector<8x128xf32>, vector<8x128xf32>, vector<128x128xf32> -> vector<128x128xf32>
    %56 = arith.addf %54, %55 : vector<128x128xf32>
    %c0_23 = arith.constant 0 : index
    %c0_24 = arith.constant 0 : index
    %57 = vector.load %arg5[%c0_23, %c0_24] : memref<128x128xf32, #tpu.memory_space<vmem>>, vector<128x128xf32>
    tpu.vector_store %arg5[%c0_23, %c0_24], %56 {strides = array<i32>} : memref<128x128xf32, #tpu.memory_space<vmem>>, vector<128x128xf32>,
    %c0_25 = arith.constant 0 : index
    %c0_26 = arith.constant 0 : index
    %58 = vector.load %arg6[%c0_25, %c0_26] : memref<128x128xf32, #tpu.memory_space<vmem>>, vector<128x128xf32>
    %cst_27 = arith.constant dense<0.000000e+00> : vector<128x128xf32>
    %59 = tpu.matmul %31, %37, %cst_27 {dimension_numbers = #tpu.dot_dimension_numbers<[0], [0], [1], [1], [0, 1, 1, 1], [], []>} : vector<8x128xf32>, vector<8x128xf32>, vector<128x128xf32> -> vector<128x128xf32>
    %60 = arith.addf %58, %59 : vector<128x128xf32>
    %c0_28 = arith.constant 0 : index
    %c0_29 = arith.constant 0 : index
    %61 = vector.load %arg6[%c0_28, %c0_29] : memref<128x128xf32, #tpu.memory_space<vmem>>, vector<128x128xf32>
    tpu.vector_store %arg6[%c0_28, %c0_29], %60 {strides = array<i32>} : memref<128x128xf32, #tpu.memory_space<vmem>>, vector<128x128xf32>,
    %c2_i32 = arith.constant 2 : i32
    %62 = arith.cmpi eq, %arg0, %c2_i32 : i32
    %63 = arith.extui %62 : i1 to i32
    %c0_i32_30 = arith.constant 0 : i32
    %64 = arith.cmpi ne, %63, %c0_i32_30 : i32
    scf.if %64 {
      %c0_31 = arith.constant 0 : index
      %c0_32 = arith.constant 0 : index
      %65 = vector.load %arg5[%c0_31, %c0_32] : memref<128x128xf32, #tpu.memory_space<vmem>>, vector<128x128xf32>
      %c0_33 = arith.constant 0 : index
      %c0_34 = arith.constant 0 : index
      %66 = vector.load %arg6[%c0_33, %c0_34] : memref<128x128xf32, #tpu.memory_space<vmem>>, vector<128x128xf32>
      %c0_35 = arith.constant 0 : index
      %c0_36 = arith.constant 0 : index
      %67 = vector.load %arg8[%c0_35, %c0_36] : memref<1x128xf32, #tpu.memory_space<vmem>>, vector<1x128xf32>
      %68 = vector.shape_cast %67 : vector<1x128xf32> to vector<1x1x128xf32>
      %cst_37 = arith.constant dense<0.000000e+00> : vector<1xf32>
      %69 = vector.multi_reduction <add>, %68, %cst_37 [1, 2] : vector<1x1x128xf32> to vector<1xf32>
      %70 = vector.shape_cast %69 : vector<1xf32> to vector<1x1x1xf32>
      %71 = vector.extract %70[0, 0, 0] : f32 from vector<1x1x1xf32>
      %c0_38 = arith.constant 0 : index
      %c0_39 = arith.constant 0 : index
      %72 = vector.load %arg7[%c0_38, %c0_39] : memref<1x128xf32, #tpu.memory_space<vmem>>, vector<1x128xf32>
      %73 = vector.shape_cast %72 : vector<1x128xf32> to vector<1x1x128xf32>
      %cst_40 = arith.constant dense<0.000000e+00> : vector<1xf32>
      %74 = vector.multi_reduction <add>, %73, %cst_40 [1, 2] : vector<1x1x128xf32> to vector<1xf32>
      %75 = vector.shape_cast %74 : vector<1xf32> to vector<1x1x1xf32>
      %76 = vector.extract %75[0, 0, 0] : f32 from vector<1x1x1xf32>
      %77 = arith.subf %71, %76 : f32
      %cst_41 = arith.constant 2.000000e+01 : f32
      %78 = arith.divf %77, %cst_41 : f32
      %c1 = arith.constant 1 : index
      %79 = memref.load %arg4[%c1] : memref<3xf32, #tpu.memory_space<smem>>
      memref.store %78, %arg4[%c1] : memref<3xf32, #tpu.memory_space<smem>>
      %80 = tpu.iota {dimensions = array<i32: 0>} : vector<128x128xi32>
      %81 = tpu.iota {dimensions = array<i32: 1>} : vector<128x128xi32>
      %82 = arith.cmpi eq, %80, %81 : vector<128x128xi32>
      %cst_42 = arith.constant 0.000000e+00 : f32
      %83 = vector.broadcast %cst_42 : f32 to vector<128x128xf32>
      %84 = arith.select %82, %66, %83 : vector<128x128xi1>, vector<128x128xf32>
      %85 = vector.shape_cast %84 : vector<128x128xf32> to vector<1x128x128xf32>
      %cst_43 = arith.constant dense<0.000000e+00> : vector<1xf32>
      %86 = vector.multi_reduction <add>, %85, %cst_43 [1, 2] : vector<1x128x128xf32> to vector<1xf32>
      %87 = vector.shape_cast %86 : vector<1xf32> to vector<1x1x1xf32>
      %88 = vector.extract %87[0, 0, 0] : f32 from vector<1x1x1xf32>
      %cst_44 = arith.constant 0.000000e+00 : f32
      %89 = arith.subf %cst_44, %88 : f32
      %cst_45 = arith.constant 2.000000e+01 : f32
      %90 = arith.divf %89, %cst_45 : f32
      %c0_46 = arith.constant 0 : index
      %91 = memref.load %arg4[%c0_46] : memref<3xf32, #tpu.memory_space<smem>>
      memref.store %90, %arg4[%c0_46] : memref<3xf32, #tpu.memory_space<smem>>
      %cst_47 = arith.constant dense<0.000000e+00> : vector<128xf32>
      %92 = vector.multi_reduction <add>, %65, %cst_47 [0] : vector<128x128xf32> to vector<128xf32>
      %93 = vector.shape_cast %92 : vector<128xf32> to vector<1x128xf32>
      %cst_48 = arith.constant 2.000000e+01 : f32
      %94 = arith.mulf %cst_48, %71 : f32
      %95 = arith.mulf %93, %67 : vector<1x128xf32>
      %96 = vector.shape_cast %95 : vector<1x128xf32> to vector<1x1x128xf32>
      %cst_49 = arith.constant dense<0.000000e+00> : vector<1xf32>
      %97 = vector.multi_reduction <add>, %96, %cst_49 [1, 2] : vector<1x1x128xf32> to vector<1xf32>
      %98 = vector.shape_cast %97 : vector<1xf32> to vector<1x1x1xf32>
      %99 = vector.extract %98[0, 0, 0] : f32 from vector<1x1x1xf32>
      %100 = arith.subf %94, %99 : f32
      %cst_50 = arith.constant dense<0.000000e+00> : vector<128xf32>
      %101 = vector.multi_reduction <add>, %65, %cst_50 [1] : vector<128x128xf32> to vector<128xf32>
      %102 = vector.shape_cast %101 : vector<128xf32> to vector<128x1xf32>
      %cst_51 = arith.constant dense<0.000000e+00> : vector<128xf32>
      %103 = vector.multi_reduction <add>, %66, %cst_51 [1] : vector<128x128xf32> to vector<128xf32>
      %104 = vector.shape_cast %103 : vector<128xf32> to vector<128x1xf32>
      %105 = arith.mulf %102, %104 : vector<128x1xf32>
      %106 = vector.shape_cast %105 : vector<128x1xf32> to vector<1x128x1xf32>
      %cst_52 = arith.constant dense<0.000000e+00> : vector<1xf32>
      %107 = vector.multi_reduction <add>, %106, %cst_52 [1, 2] : vector<1x128x1xf32> to vector<1xf32>
      %108 = vector.shape_cast %107 : vector<1xf32> to vector<1x1x1xf32>
      %109 = vector.extract %108[0, 0, 0] : f32 from vector<1x1x1xf32>
      %110 = arith.mulf %65, %66 : vector<128x128xf32>
      %111 = vector.shape_cast %110 : vector<128x128xf32> to vector<1x128x128xf32>
      %cst_53 = arith.constant dense<0.000000e+00> : vector<1xf32>
      %112 = vector.multi_reduction <add>, %111, %cst_53 [1, 2] : vector<1x128x128xf32> to vector<1xf32>
      %113 = vector.shape_cast %112 : vector<1xf32> to vector<1x1x1xf32>
      %114 = vector.extract %113[0, 0, 0] : f32 from vector<1x1x1xf32>
      %115 = arith.subf %109, %114 : f32
      %116 = arith.subf %100, %115 : f32
      %cst_54 = arith.constant 2.000000e+01 : f32
      %cst_55 = arith.constant 2.000000e+01 : f32
      %117 = arith.mulf %cst_54, %cst_55 : f32
      %118 = arith.divf %116, %117 : f32
      %c2 = arith.constant 2 : index
      %119 = memref.load %arg4[%c2] : memref<3xf32, #tpu.memory_space<smem>>
      memref.store %118, %arg4[%c2] : memref<3xf32, #tpu.memory_space<smem>>
    } else {
    }
    return
  }
  func.func @transform_0(%arg0: i32) -> (i32, i32) {
    %c0_i32 = arith.constant 0 : i32
    %c0_i32_0 = arith.constant 0 : i32
    return %arg0, %c0_i32 : i32, i32
  }
  func.func @transform_1(%arg0: i32) -> (i32, i32) {
    %c0_i32 = arith.constant 0 : i32
    %c0_i32_0 = arith.constant 0 : i32
    return %arg0, %c0_i32 : i32, i32
  }
  func.func @transform_2(%arg0: i32) -> (i32, i32) {
    %c0_i32 = arith.constant 0 : i32
    %c0_i32_0 = arith.constant 0 : i32
    return %arg0, %c0_i32 : i32, i32
  }
  func.func @transform_3(%arg0: i32) -> i32 {
    %c0_i32 = arith.constant 0 : i32
    %c0_i32_0 = arith.constant 0 : i32
    return %c0_i32 : i32
  }
}

</mosaic_0001>

<llo_original>
// kernel: tpu_custom_call.1
$region0: #{tpu_custom_call.1}
  #allocation0 [shape = 'u32[]', space=smem, size = 0x4, offset = 0x4, fixed_abs, tag = 'smem constant byte address 0x4 - core index']
  #allocation1 [shape = 'u32[144,128]{1,0:T(1,128)}', space=vmem, size = 0x12000, scoped, tag = 'internal scratch']
  #allocation2 [shape = 'f32[128,128]{1,0:T(8,128)}', space=vmem, size = 0x10000, scoped, tag = 'scratch operand']
  #allocation3 [shape = 'f32[128,128]{1,0:T(8,128)}', space=vmem, size = 0x10000, scoped, tag = 'scratch operand']
  #allocation4 [shape = 'f32[1,128]{1,0:T(1,128)}', space=vmem, size = 0x200, scoped, tag = 'scratch operand']
  #allocation5 [shape = 'f32[1,128]{1,0:T(1,128)}', space=vmem, size = 0x200, scoped, tag = 'scratch operand']
  #allocation6 [shape = 'f32[1,128]{1,0:T(1,128)}', space=vmem, size = 0x200, scoped, tag = 'scratch operand']
  %s0 = inlined_call_operand.vmem [shape: f32[24,128], index: 0, kind: input, shape index: {}]
  %s1 = inlined_call_operand.vmem [shape: s32[24,1], index: 1, kind: input, shape index: {}]
  %s2 = inlined_call_operand.hbm [shape: f32[24,128], index: 2, kind: input, shape index: {}]
  %s3 = inlined_call_operand.hbm [shape: f32[3], index: 3, kind: output, shape index: {}]
  %s4 = sld [smem:[#allocation0]]
  $region57: #{tpu_custom_call.1} parent=0
    _
  %s6 = ssub.s32 1, %s4
  %s7 = scalar_select 0, %s6, %s4
  $region1: #{tpu_custom_call.1} parent=0
    #allocation7 [shape = 'u8[8192]{0}', space=vmem, size = 0x2000, scoped, tag = 'input window, operand 2']
    #allocation8 [shape = 's32[2]{0}', space=sflag, size = 0x8, scoped, tag = 'scoped memory for tpu_custom_call.1']
    #allocation9 [shape = 's32[2]{0}', space=sflag, size = 0x8, scoped, tag = 'scoped memory for tpu_custom_call.1']
    #allocation10 [shape = 'u8[512]{0}', space=smem, size = 0x200, scoped, tag = 'output window, operand 0, single buffered']
    %8 = vsyncpa [#allocation8], 0
    %s9 = scalar_lea.sflag [#allocation8], 1
    %10 = vsyncpa %s9, 0
    %11 = vsyncpa [#allocation9], 0
    loop: start=0, step=1, limit=5
    $region2: #{tpu_custom_call.1} parent=1 // loop_pre_header
      _
    $region3: #{tpu_custom_call.1} parent=1 // loop_header
      %s13 = sphi 0, %s17
      %p14 = scmp.ge.s32.totalorder %s13, 5
      %s23 = sphi 0, %s25
      %s26 = sphi 0, %s23
      %s27 = sphi 0, %s26
      %s43 = sphi 0, %s27
      %s49 = sphi 0, %s51
      %s52 = sphi 0, %s49
      %s53 = sphi 0, %s52
      %s69 = sphi 0, %s53
      %s75 = sphi 0, %s77
      %s78 = sphi 0, %s75
      %s79 = sphi 0, %s78
      %s95 = sphi 0, %s79
      %s99 = sphi 0, %s99
      %s101 = sphi 0, %s99
      %s102 = sphi 0, %s101
      %s116 = sphi 0, %s102
    $region4: #{tpu_custom_call.1} parent=1 // loop_header_branch
      %16 = sbr.rel (%p14) target = $region8
    $region5: #{tpu_custom_call.1} parent=1 // loop_body
      %s18 = ssub.s32 %s13, 1
      %s19 = ssub.s32 %s13, 2
      %s20 = sadd.s32 %s13, 1
      %s21 = ssub.s32 %s13, %s20
      %p22 = scmp.eq.s32.totalorder %s21, 0
      %s24 = sadd.s32 %s23, 1
      %s25 = scalar_select %p22, %s23, %s24
      %p28 = pneg %p22
      %p29 = scmp.eq.s32.totalorder %s13, 2
      %p30 = por %p28, %p29
      %p31 = scmp.ne.s32.totalorder %s23, %s26
      %p32 = scmp.eq.s32.totalorder %s13, 0
      %p33 = por %p31, %p32
      %p34 = scmp.ne.s32.totalorder %s23, %s26
      %p35 = scmp.eq.s32.totalorder %s18, 2
      %p36 = por %p34, %p35
      %p37 = scmp.ne.s32.totalorder %s26, %s27
      %p38 = scmp.eq.s32.totalorder %s18, 0
      %p39 = por %p37, %p38
      %p40 = scmp.ne.s32.totalorder %s26, %s27
      %p41 = scmp.eq.s32.totalorder %s19, 2
      %p42 = por %p40, %p41
      %p44 = scmp.ne.s32.totalorder %s27, %s43
      %p45 = scmp.eq.s32.totalorder %s19, 0
      %p46 = por %p44, %p45
      %s47 = ssub.s32 %s13, %s20
      %p48 = scmp.eq.s32.totalorder %s47, 0
      %s50 = sadd.s32 %s49, 1
      %s51 = scalar_select %p48, %s49, %s50
      %p54 = pneg %p48
      %p55 = scmp.eq.s32.totalorder %s13, 2
      %p56 = por %p54, %p55
      %p57 = scmp.ne.s32.totalorder %s49, %s52
      %p58 = scmp.eq.s32.totalorder %s13, 0
      %p59 = por %p57, %p58
      %p60 = scmp.ne.s32.totalorder %s49, %s52
      %p61 = scmp.eq.s32.totalorder %s18, 2
      %p62 = por %p60, %p61
      %p63 = scmp.ne.s32.totalorder %s52, %s53
      %p64 = scmp.eq.s32.totalorder %s18, 0
      %p65 = por %p63, %p64
      %p66 = scmp.ne.s32.totalorder %s52, %s53
      %p67 = scmp.eq.s32.totalorder %s19, 2
      %p68 = por %p66, %p67
      %p70 = scmp.ne.s32.totalorder %s53, %s69
      %p71 = scmp.eq.s32.totalorder %s19, 0
      %p72 = por %p70, %p71
      %s73 = ssub.s32 %s13, %s20
      %p74 = scmp.eq.s32.totalorder %s73, 0
      %s76 = sadd.s32 %s75, 1
      %s77 = scalar_select %p74, %s75, %s76
      %p80 = pneg %p74
      %p81 = scmp.eq.s32.totalorder %s13, 2
      %p82 = por %p80, %p81
      %p83 = scmp.ne.s32.totalorder %s75, %s78
      %p84 = scmp.eq.s32.totalorder %s13, 0
      %p85 = por %p83, %p84
      %p86 = scmp.ne.s32.totalorder %s75, %s78
      %p87 = scmp.eq.s32.totalorder %s18, 2
      %p88 = por %p86, %p87
      %p89 = scmp.ne.s32.totalorder %s78, %s79
      %p90 = scmp.eq.s32.totalorder %s18, 0
      %p91 = por %p89, %p90
      %p92 = scmp.ne.s32.totalorder %s78, %s79
      %p93 = scmp.eq.s32.totalorder %s19, 2
      %p94 = por %p92, %p93
      %p96 = scmp.ne.s32.totalorder %s79, %s95
      %p97 = scmp.eq.s32.totalorder %s19, 0
      %p98 = por %p96, %p97
      %s100 = sadd.s32 %s99, 1
      %p103 = scmp.eq.s32.totalorder %s13, 2
      %p104 = scmp.ne.s32.totalorder %s99, %s101
      %p105 = scmp.eq.s32.totalorder %s13, 0
      %p106 = por %p104, %p105
      %p107 = scmp.ne.s32.totalorder %s99, %s101
      %p108 = scmp.eq.s32.totalorder %s18, 2
      %p109 = por %p107, %p108
      %p110 = scmp.ne.s32.totalorder %s101, %s102
      %p111 = scmp.eq.s32.totalorder %s18, 0
      %p112 = por %p110, %p111
      %p113 = scmp.ne.s32.totalorder %s101, %s102
      %p114 = scmp.eq.s32.totalorder %s19, 2
      %p115 = por %p113, %p114
      %p117 = scmp.ne.s32.totalorder %s102, %s116
      %p118 = scmp.eq.s32.totalorder %s19, 0
      %p119 = por %p117, %p118
      %p120 = scmp.le.s32.totalorder 1, %s13
      %p121 = scmp.lt.s32.totalorder %s13, 4
      %p122 = pnand %p120, %p121
      %p123 = pneg %p122
      // Predicated region
      $region9: #{tpu_custom_call.1} parent=5 // pred_check
        _
      $region10: #{tpu_custom_call.1} parent=5 // pred_check_branch
        %125 = sbr.rel (%p122) target = $region12
      $region11: #{tpu_custom_call.1} parent=5 // pred_region
        %s126 = ssub.s32 %s13, 1
      $region12: #{tpu_custom_call.1} parent=5 // pred_fallthru
        _
      %p127 = scmp.lt.s32.totalorder %s13, 3
      // Predicated region
      $region13: #{tpu_custom_call.1} parent=5 // pred_check
        %p128 = pneg %p127
      $region14: #{tpu_custom_call.1} parent=5 // pred_check_branch
        %130 = sbr.rel (%p128) target = $region16
      $region15: #{tpu_custom_call.1} parent=5 // pred_region
        // Predicated region
        $region17: #{tpu_custom_call.1} parent=15 // pred_check
          %p131 = pneg %p33
        $region18: #{tpu_custom_call.1} parent=15 // pred_check_branch
          %133 = sbr.rel (%p131) target = $region20
        $region19: #{tpu_custom_call.1} parent=15 // pred_region
          %p134 = scmp.lt.s32.totalorder %s13, 2
          %s135 = scalar_select %p134, %s13, 2
          %s136 = smul.addr %s135, 8
          %s137 = scalar_lea.vmem %s0, %s136
        $region20: #{tpu_custom_call.1} parent=15 // pred_fallthru
          _
        // Predicated region
        $region21: #{tpu_custom_call.1} parent=15 // pred_check
          %p138 = pneg %p59
        $region22: #{tpu_custom_call.1} parent=15 // pred_check_branch
          %140 = sbr.rel (%p138) target = $region24
        $region23: #{tpu_custom_call.1} parent=15 // pred_region
          %p141 = scmp.lt.s32.totalorder %s13, 2
          %s142 = scalar_select %p141, %s13, 2
          %s143 = smul.addr %s142, 8
          %s144 = scalar_lea.vmem %s1, %s143
        $region24: #{tpu_custom_call.1} parent=15 // pred_fallthru
          _
        // Predicated region
        $region25: #{tpu_custom_call.1} parent=15 // pred_check
          %p145 = pneg %p85
        $region26: #{tpu_custom_call.1} parent=15 // pred_check_branch
          %147 = sbr.rel (%p145) target = $region28
        $region27: #{tpu_custom_call.1} parent=15 // pred_region
          %s148 = sand.u32 %s75, 1
          %s149 = scalar_lea.sflag [#allocation8], %s148
          %s150 = sand.u32 %s75, 1
          %s151 = smul.addr %s150, 8
          %s152 = scalar_lea.vmem [#allocation7], %s151
          %s154 = ssub.s32 128, 128
          %155 = vsyncadd %s149, %s154
          %s156 = smul.addr %s13, 128
          %s157 = scalar_lea.hbm %s2, %s156
          %s159 = sshll.u32 %s152, 4
          %s160 = int_to_ptr.vmem [resolvable:$true] %s159
          %162 = dma.hbm_to_vmem [thread:$0]  %s157, 128, %s160, %s149
        $region28: #{tpu_custom_call.1} parent=15 // pred_fallthru
          _
      $region16: #{tpu_custom_call.1} parent=5 // pred_fallthru
        _
      %p163 = scmp.le.s32.totalorder 1, %s13
      %p164 = scmp.lt.s32.totalorder %s13, 4
      %p165 = pnand %p163, %p164
      %p166 = pneg %p165
      // Predicated region
      $region29: #{tpu_custom_call.1} parent=5 // pred_check
        _
      $region30: #{tpu_custom_call.1} parent=5 // pred_check_branch
        %168 = sbr.rel (%p165) target = $region32
      $region31: #{tpu_custom_call.1} parent=5 // pred_region
        %s169 = ssub.s32 %s13, 1
        %s170 = sand.u32 %s78, 1
        %s171 = scalar_lea.sflag [#allocation8], %s170
        %s172 = sand.u32 %s78, 1
        %s173 = smul.addr %s172, 8
        %s174 = scalar_lea.vmem [#allocation7], %s173
        // Predicated region
        $region33: #{tpu_custom_call.1} parent=31 // pred_check
          %p175 = pneg %p91
        $region34: #{tpu_custom_call.1} parent=31 // pred_check_branch
          %177 = sbr.rel (%p175) target = $region36
        $region35: #{tpu_custom_call.1} parent=31 // pred_region
          %178 = dma.done %s171, 128
        $region36: #{tpu_custom_call.1} parent=31 // pred_fallthru
          _
        %p179 = scmp.lt.s32.totalorder %s18, 2
        %s180 = scalar_select %p179, %s18, 2
        %s181 = smul.addr %s180, 8
        %s182 = scalar_lea.vmem %s0, %s181
        %p183 = pneg %p39
        %p184 = pneg %p36
        %p185 = scmp.lt.s32.totalorder %s18, 2
        %s186 = scalar_select %p185, %s18, 2
        %s187 = smul.addr %s186, 8
        %s188 = scalar_lea.vmem %s1, %s187
        %p189 = pneg %p65
        %p190 = pneg %p62
        %s191 = sand.u32 %s78, 1
        %s192 = scalar_lea.sflag [#allocation8], %s191
        %s193 = sand.u32 %s78, 1
        %s194 = smul.addr %s193, 8
        %s195 = scalar_lea.vmem [#allocation7], %s194
        %p196 = pneg %p91
        %p197 = pneg %p88
        %p198 = pneg %p112
        %p199 = pneg %p109
        %p200 = scmp.lt.s32.totalorder %s18, 2
        %s201 = scalar_select %p200, %s18, 2
        %s202 = smul.addr %s201, 8
        %s203 = scalar_lea.vmem %s0, %s202
        %p204 = scmp.lt.s32.totalorder %s18, 2
        %s205 = scalar_select %p204, %s18, 2
        %s206 = smul.addr %s205, 8
        %s207 = scalar_lea.vmem %s1, %s206
        %p208 = scmp.eq.s32.totalorder %s18, 0
        // Predicated region
        $region37: #{tpu_custom_call.1} parent=31 // pred_check
          %p209 = pneg %p208
        $region38: #{tpu_custom_call.1} parent=31 // pred_check_branch
          %211 = sbr.rel (%p209) target = $region40
        $region39: #{tpu_custom_call.1} parent=31 // pred_region
          %212 = vst [vmem:[#allocation2] sm:$0xff] 0.0
          %213 = vst [vmem:[#allocation2 + $0x8] sm:$0xff] 0.0
          %214 = vst [vmem:[#allocation2 + $0x10] sm:$0xff] 0.0
          %215 = vst [vmem:[#allocation2 + $0x18] sm:$0xff] 0.0
          %216 = vst [vmem:[#allocation2 + $0x20] sm:$0xff] 0.0
          %217 = vst [vmem:[#allocation2 + $0x28] sm:$0xff] 0.0
          %218 = vst [vmem:[#allocation2 + $0x30] sm:$0xff] 0.0
          %219 = vst [vmem:[#allocation2 + $0x38] sm:$0xff] 0.0
          %220 = vst [vmem:[#allocation2 + $0x40] sm:$0xff] 0.0
          %221 = vst [vmem:[#allocation2 + $0x48] sm:$0xff] 0.0
          %222 = vst [vmem:[#allocation2 + $0x50] sm:$0xff] 0.0
          %223 = vst [vmem:[#allocation2 + $0x58] sm:$0xff] 0.0
          %224 = vst [vmem:[#allocation2 + $0x60] sm:$0xff] 0.0
          %225 = vst [vmem:[#allocation2 + $0x68] sm:$0xff] 0.0
          %226 = vst [vmem:[#allocation2 + $0x70] sm:$0xff] 0.0
          %227 = vst [vmem:[#allocation2 + $0x78] sm:$0xff] 0.0
          %228 = vst [vmem:[#allocation3] sm:$0xff] 0.0
          %229 = vst [vmem:[#allocation3 + $0x8] sm:$0xff] 0.0
          %230 = vst [vmem:[#allocation3 + $0x10] sm:$0xff] 0.0
          %231 = vst [vmem:[#allocation3 + $0x18] sm:$0xff] 0.0
          %232 = vst [vmem:[#allocation3 + $0x20] sm:$0xff] 0.0
          %233 = vst [vmem:[#allocation3 + $0x28] sm:$0xff] 0.0
          %234 = vst [vmem:[#allocation3 + $0x30] sm:$0xff] 0.0
          %235 = vst [vmem:[#allocation3 + $0x38] sm:$0xff] 0.0
          %236 = vst [vmem:[#allocation3 + $0x40] sm:$0xff] 0.0
          %237 = vst [vmem:[#allocation3 + $0x48] sm:$0xff] 0.0
          %238 = vst [vmem:[#allocation3 + $0x50] sm:$0xff] 0.0
          %239 = vst [vmem:[#allocation3 + $0x58] sm:$0xff] 0.0
          %240 = vst [vmem:[#allocation3 + $0x60] sm:$0xff] 0.0
          %241 = vst [vmem:[#allocation3 + $0x68] sm:$0xff] 0.0
          %242 = vst [vmem:[#allocation3 + $0x70] sm:$0xff] 0.0
          %243 = vst [vmem:[#allocation3 + $0x78] sm:$0xff] 0.0
          %244 = vst [vmem:[#allocation4] sm:$0x1] 0.0
          %245 = vst [vmem:[#allocation5] sm:$0x1] 0.0
          %246 = vst [vmem:[#allocation6] sm:$0x1] 0.0
        $region40: #{tpu_custom_call.1} parent=31 // pred_fallthru
          _
        %v247 = vld [vmem:[%s203] sm:$0xff]
        %v248 = vld [vmem:[%s207] sm:$0xff]
        %v249 = vld [vmem:[%s174] sm:$0xff]
        %v250 = vlaneseq
        %v251 = vand.u32 %v250, 127
        %v252 = vlaneseq
        %v253 = vshrl.u32 %v252, 7
        %s254 = smul.u32 %s18, 8
        %v255 = vstv %s254
        %v256 = vadd.s32 %v253, %v255
        %vm257 = vcmp.lt.s32.totalorder %v256, 20
        %vm258 = vcmp.lt.s32.totalorder %v251, 10
        %v259 = vsel %vm258, %v247, -1e+30
        %260 = vmax.xlane.f32.xlu0 %v259
        %v261 = vpop.xlane.xlu0 %260
        %v262 = vsub.f32 %v259, %v261
        %v263 = vmul.f32 %v262, 1.442695
        %v264 = vpow.pop %v263
        %265 = vadd.xlane.f32.xlu0 %v264
        %v266 = vpop.xlane.xlu0 %265
        %v267 = vrcp.pop %v266
        %v268 = vmul.f32 %v264, %v267
        %v269 = vlog2.pop %v266
        %v270 = vmul.f32 %v269, 0.6931472
        %v271 = vsub.f32 %v262, %v270
        %v272 = vsel %vm258, %v271, 0.0
        %273 = vset.pattern.permute.xlu0 0
        %274 = vperm.xlu0 %273, %v248
        %v275 = vpop.permute.xlu0 %274
        %vm276 = vcmp.eq.s32.totalorder %v251, %v275
        %v277 = vsel %vm257, 1, 0
        %vm278 = vcmp.eq.s32.totalorder %v277, 1
        %vm279 = vmand %vm276, %vm278
        %v280 = vsel %vm279, 1, 0
        %v281 = vcvt.s32.f32 %v280
        %v282 = vld [vmem:[#allocation4] sm:$0x1]
        %v283 = vmul.f32 %v268, %v249
        %v284 = vrot.slane %v283, 4
        %v285 = vadd.f32 %v283, %v284
        %v286 = vrot.slane %v285, 2
        %v287 = vadd.f32 %v285, %v286
        %v288 = vrot.slane %v287, 1
        %v289 = vadd.f32 %v287, %v288
        %v290 = vadd.f32 %v282, %v289
        %291 = vst [vmem:[#allocation4] sm:$0x1] %v290
        %v292 = vmul.f32 %v268, %v272
        %293 = vadd.xlane.f32.xlu0 %v292
        %v294 = vpop.xlane.xlu0 %293
        %v295 = vld [vmem:[#allocation5] sm:$0x1]
        %v296 = vmul.f32 %v281, %v294
        %v297 = vrot.slane %v296, 4
        %v298 = vadd.f32 %v296, %v297
        %v299 = vrot.slane %v298, 2
        %v300 = vadd.f32 %v298, %v299
        %v301 = vrot.slane %v300, 1
        %v302 = vadd.f32 %v300, %v301
        %v303 = vadd.f32 %v295, %v302
        %304 = vst [vmem:[#allocation5] sm:$0x1] %v303
        %v305 = vld [vmem:[#allocation2] sm:$0xff]
        %v306 = vld [vmem:[#allocation2 + $0x8] sm:$0xff]
        %v307 = vld [vmem:[#allocation2 + $0x10] sm:$0xff]
        %v308 = vld [vmem:[#allocation2 + $0x18] sm:$0xff]
        %v309 = vld [vmem:[#allocation2 + $0x20] sm:$0xff]
        %v310 = vld [vmem:[#allocation2 + $0x28] sm:$0xff]
        %v311 = vld [vmem:[#allocation2 + $0x30] sm:$0xff]
        %v312 = vld [vmem:[#allocation2 + $0x38] sm:$0xff]
        %v313 = vld [vmem:[#allocation2 + $0x40] sm:$0xff]
        %v314 = vld [vmem:[#allocation2 + $0x48] sm:$0xff]
        %v315 = vld [vmem:[#allocation2 + $0x50] sm:$0xff]
        %v316 = vld [vmem:[#allocation2 + $0x58] sm:$0xff]
        %v317 = vld [vmem:[#allocation2 + $0x60] sm:$0xff]
        %v318 = vld [vmem:[#allocation2 + $0x68] sm:$0xff]
        %v319 = vld [vmem:[#allocation2 + $0x70] sm:$0xff]
        %v320 = vld [vmem:[#allocation2 + $0x78] sm:$0xff]
        %321 = vxpose.xlu0.b32.start [1/16] %v268, 128
        %322 = vxpose.xlu0.b32.cont [2/16] 0.0, 128
        %323 = vxpose.xlu0.b32.cont [3/16] 0.0, 128
        %324 = vxpose.xlu0.b32.cont [4/16] 0.0, 128
        %325 = vxpose.xlu0.b32.cont [5/16] 0.0, 128
        %326 = vxpose.xlu0.b32.cont [6/16] 0.0, 128
        %327 = vxpose.xlu0.b32.cont [7/16] 0.0, 128
        %328 = vxpose.xlu0.b32.cont [8/16] 0.0, 128
        %329 = vxpose.xlu0.b32.cont [9/16] 0.0, 128
        %330 = vxpose.xlu0.b32.cont [10/16] 0.0, 128
        %331 = vxpose.xlu0.b32.cont [11/16] 0.0, 128
        %332 = vxpose.xlu0.b32.cont [12/16] 0.0, 128
        %333 = vxpose.xlu0.b32.cont [13/16] 0.0, 128
        %334 = vxpose.xlu0.b32.cont [14/16] 0.0, 128
        %335 = vxpose.xlu0.b32.cont [15/16] 0.0, 128
        %336 = vxpose.xlu0.b32.end [16/16] 0.0, 128
        %v337 = vpop.trf.xlu0
        %v338 = vpop.trf.xlu0
        %v339 = vpop.trf.xlu0
        %v340 = vpop.trf.xlu0
        %v341 = vpop.trf.xlu0
        %v342 = vpop.trf.xlu0
        %v343 = vpop.trf.xlu0
        %v344 = vpop.trf.xlu0
        %v345 = vpop.trf.xlu0
        %v346 = vpop.trf.xlu0
        %v347 = vpop.trf.xlu0
        %v348 = vpop.trf.xlu0
        %v349 = vpop.trf.xlu0
        %v350 = vpop.trf.xlu0
        %v351 = vpop.trf.xlu0
        %v352 = vpop.trf.xlu0
        %vm353 = vcmask 64512
        %v355 = vsel %vm353, %v337, 0
        %v358 = vsel %vm353, %v338, 0
        %v361 = vsel %vm353, %v339, 0
        %v364 = vsel %vm353, %v340, 0
        %v367 = vsel %vm353, %v341, 0
        %v370 = vsel %vm353, %v342, 0
        %v373 = vsel %vm353, %v343, 0
        %v376 = vsel %vm353, %v344, 0
        %v379 = vsel %vm353, %v345, 0
        %v382 = vsel %vm353, %v346, 0
        %v385 = vsel %vm353, %v347, 0
        %v388 = vsel %vm353, %v348, 0
        %v391 = vsel %vm353, %v349, 0
        %v394 = vsel %vm353, %v350, 0
        %v397 = vsel %vm353, %v351, 0
        %v400 = vsel %vm353, %v352, 0
        %402 = vmatprep.subr.mxu0 0.0
        %403 = vmatpush1.msra.mxu0 0.0
        %404 = vmatprep.subr.mxu0 0.0
        %405 = vmatpush1.msra.mxu0 0.0
        %406 = vmatprep.subr.mxu0 0.0
        %407 = vmatpush1.msra.mxu0 0.0
        %408 = vmatprep.subr.mxu0 0.0
        %409 = vmatpush1.msra.mxu0 0.0
        %410 = vmatprep.subr.mxu0 0.0
        %411 = vmatpush1.msra.mxu0 0.0
        %412 = vmatprep.subr.mxu0 0.0
        %413 = vmatpush1.msra.mxu0 0.0
        %414 = vmatprep.subr.mxu0 0.0
        %415 = vmatpush1.msra.mxu0 0.0
        %416 = vmatprep.subr.mxu0 0.0
        %417 = vmatpush1.msra.mxu0 0.0
        %418 = vmatprep.subr.mxu0 0.0
        %419 = vmatpush1.msra.mxu0 0.0
        %420 = vmatprep.subr.mxu0 0.0
        %421 = vmatpush1.msra.mxu0 0.0
        %422 = vmatprep.subr.mxu0 0.0
        %423 = vmatpush1.msra.mxu0 0.0
        %424 = vmatprep.subr.mxu0 0.0
        %425 = vmatpush1.msra.mxu0 0.0
        %426 = vmatprep.subr.mxu0 0.0
        %427 = vmatpush1.msra.mxu0 0.0
        %428 = vmatprep.subr.mxu0 0.0
        %429 = vmatpush1.msra.mxu0 0.0
        %430 = vmatprep.subr.mxu0 0.0
        %431 = vmatpush1.msra.mxu0 0.0
        %432 = vmatprep.subr.mxu0 0.0
        %433 = vmatpush1.msra.mxu0 %v281
        %434 = vmatprep.subr.mxu0 0.0
        %435 = vmatpush2.msra.mxu0 0.0
        %436 = vmatprep.subr.mxu0 0.0
        %437 = vmatpush2.msra.mxu0 0.0
        %438 = vmatprep.subr.mxu0 0.0
        %439 = vmatpush2.msra.mxu0 0.0
        %440 = vmatprep.subr.mxu0 0.0
        %441 = vmatpush2.msra.mxu0 0.0
        %442 = vmatprep.subr.mxu0 0.0
        %443 = vmatpush2.msra.mxu0 0.0
        %444 = vmatprep.subr.mxu0 0.0
        %445 = vmatpush2.msra.mxu0 0.0
        %446 = vmatprep.subr.mxu0 0.0
        %447 = vmatpush2.msra.mxu0 0.0
        %448 = vmatprep.subr.mxu0 0.0
        %449 = vmatpush2.msra.mxu0 0.0
        %450 = vmatprep.subr.mxu0 0.0
        %451 = vmatpush2.msra.mxu0 0.0
        %452 = vmatprep.subr.mxu0 0.0
        %453 = vmatpush2.msra.mxu0 0.0
        %454 = vmatprep.subr.mxu0 0.0
        %455 = vmatpush2.msra.mxu0 0.0
        %456 = vmatprep.subr.mxu0 0.0
        %457 = vmatpush2.msra.mxu0 0.0
        %458 = vmatprep.subr.mxu0 0.0
        %459 = vmatpush2.msra.mxu0 0.0
        %460 = vmatprep.subr.mxu0 0.0
        %461 = vmatpush2.msra.mxu0 0.0
        %462 = vmatprep.subr.mxu0 0.0
        %463 = vmatpush2.msra.mxu0 0.0
        %464 = vmatprep.subr.mxu0 0.0
        %465 = vmatpush2.msra.mxu0 0.0
        %466 = vmatprep.mubr.f32.mxu0 0.0
        %467 = vmatmul.mubr.f32.gmra.mxu0 %v355
        %v468 = vpop.f32.mrf.mxu0
        %v469 = vadd.f32 0.0, %v468
        %v470 = vpop.f32.mrf.mxu0
        %471 = vmatprep.mubr.f32.mxu0 0.0
        %472 = vmatmul.mubr.f32.gmra.mxu0 %v358
        %v473 = vpop.f32.mrf.mxu0
        %v474 = vadd.f32 0.0, %v473
        %v475 = vpop.f32.mrf.mxu0
        %476 = vmatprep.mubr.f32.mxu0 0.0
        %477 = vmatmul.mubr.f32.gmra.mxu0 %v361
        %v478 = vpop.f32.mrf.mxu0
        %v479 = vadd.f32 0.0, %v478
        %v480 = vpop.f32.mrf.mxu0
        %481 = vmatprep.mubr.f32.mxu0 0.0
        %482 = vmatmul.mubr.f32.gmra.mxu0 %v364
        %v483 = vpop.f32.mrf.mxu0
        %v484 = vadd.f32 0.0, %v483
        %v485 = vpop.f32.mrf.mxu0
        %486 = vmatprep.mubr.f32.mxu0 0.0
        %487 = vmatmul.mubr.f32.gmra.mxu0 %v367
        %v488 = vpop.f32.mrf.mxu0
        %v489 = vadd.f32 0.0, %v488
        %v490 = vpop.f32.mrf.mxu0
        %491 = vmatprep.mubr.f32.mxu0 0.0
        %492 = vmatmul.mubr.f32.gmra.mxu0 %v370
        %v493 = vpop.f32.mrf.mxu0
        %v494 = vadd.f32 0.0, %v493
        %v495 = vpop.f32.mrf.mxu0
        %496 = vmatprep.mubr.f32.mxu0 0.0
        %497 = vmatmul.mubr.f32.gmra.mxu0 %v373
        %v498 = vpop.f32.mrf.mxu0
        %v499 = vadd.f32 0.0, %v498
        %v500 = vpop.f32.mrf.mxu0
        %501 = vmatprep.mubr.f32.mxu0 0.0
        %502 = vmatmul.mubr.f32.gmra.mxu0 %v376
        %v503 = vpop.f32.mrf.mxu0
        %v504 = vadd.f32 0.0, %v503
        %v505 = vpop.f32.mrf.mxu0
        %506 = vmatprep.mubr.f32.mxu0 0.0
        %507 = vmatmul.mubr.f32.gmra.mxu0 %v379
        %v508 = vpop.f32.mrf.mxu0
        %v509 = vadd.f32 0.0, %v508
        %v510 = vpop.f32.mrf.mxu0
        %511 = vmatprep.mubr.f32.mxu0 0.0
        %512 = vmatmul.mubr.f32.gmra.mxu0 %v382
        %v513 = vpop.f32.mrf.mxu0
        %v514 = vadd.f32 0.0, %v513
        %v515 = vpop.f32.mrf.mxu0
        %516 = vmatprep.mubr.f32.mxu0 0.0
        %517 = vmatmul.mubr.f32.gmra.mxu0 %v385
        %v518 = vpop.f32.mrf.mxu0
        %v519 = vadd.f32 0.0, %v518
        %v520 = vpop.f32.mrf.mxu0
        %521 = vmatprep.mubr.f32.mxu0 0.0
        %522 = vmatmul.mubr.f32.gmra.mxu0 %v388
        %v523 = vpop.f32.mrf.mxu0
        %v524 = vadd.f32 0.0, %v523
        %v525 = vpop.f32.mrf.mxu0
        %526 = vmatprep.mubr.f32.mxu0 0.0
        %527 = vmatmul.mubr.f32.gmra.mxu0 %v391
        %v528 = vpop.f32.mrf.mxu0
        %v529 = vadd.f32 0.0, %v528
        %v530 = vpop.f32.mrf.mxu0
        %531 = vmatprep.mubr.f32.mxu0 0.0
        %532 = vmatmul.mubr.f32.gmra.mxu0 %v394
        %v533 = vpop.f32.mrf.mxu0
        %v534 = vadd.f32 0.0, %v533
        %v535 = vpop.f32.mrf.mxu0
        %536 = vmatprep.mubr.f32.mxu0 0.0
        %537 = vmatmul.mubr.f32.gmra.mxu0 %v397
        %v538 = vpop.f32.mrf.mxu0
        %v539 = vadd.f32 0.0, %v538
        %v540 = vpop.f32.mrf.mxu0
        %541 = vmatprep.mubr.f32.mxu0 0.0
        %542 = vmatmul.mubr.f32.gmra.mxu0 %v400
        %v543 = vpop.f32.mrf.mxu0
        %v544 = vadd.f32 0.0, %v543
        %v545 = vpop.f32.mrf.mxu0
        %546 = vdwg.mxu0
        %v547 = vadd.f32 %v305, %v469
        %v548 = vadd.f32 %v306, %v474
        %v549 = vadd.f32 %v307, %v479
        %v550 = vadd.f32 %v308, %v484
        %v551 = vadd.f32 %v309, %v489
        %v552 = vadd.f32 %v310, %v494
        %v553 = vadd.f32 %v311, %v499
        %v554 = vadd.f32 %v312, %v504
        %v555 = vadd.f32 %v313, %v509
        %v556 = vadd.f32 %v314, %v514
        %v557 = vadd.f32 %v315, %v519
        %v558 = vadd.f32 %v316, %v524
        %v559 = vadd.f32 %v317, %v529
        %v560 = vadd.f32 %v318, %v534
        %v561 = vadd.f32 %v319, %v539
        %v562 = vadd.f32 %v320, %v544
        %563 = vst [vmem:[#allocation2] sm:$0xff] %v547
        %564 = vst [vmem:[#allocation2 + $0x8] sm:$0xff] %v548
        %565 = vst [vmem:[#allocation2 + $0x10] sm:$0xff] %v549
        %566 = vst [vmem:[#allocation2 + $0x18] sm:$0xff] %v550
        %567 = vst [vmem:[#allocation2 + $0x20] sm:$0xff] %v551
        %568 = vst [vmem:[#allocation2 + $0x28] sm:$0xff] %v552
        %569 = vst [vmem:[#allocation2 + $0x30] sm:$0xff] %v553
        %570 = vst [vmem:[#allocation2 + $0x38] sm:$0xff] %v554
        %571 = vst [vmem:[#allocation2 + $0x40] sm:$0xff] %v555
        %572 = vst [vmem:[#allocation2 + $0x48] sm:$0xff] %v556
        %573 = vst [vmem:[#allocation2 + $0x50] sm:$0xff] %v557
        %574 = vst [vmem:[#allocation2 + $0x58] sm:$0xff] %v558
        %575 = vst [vmem:[#allocation2 + $0x60] sm:$0xff] %v559
        %576 = vst [vmem:[#allocation2 + $0x68] sm:$0xff] %v560
        %577 = vst [vmem:[#allocation2 + $0x70] sm:$0xff] %v561
        %578 = vst [vmem:[#allocation2 + $0x78] sm:$0xff] %v562
        %v579 = vld [vmem:[#allocation3] sm:$0xff]
        %v580 = vld [vmem:[#allocation3 + $0x8] sm:$0xff]
        %v581 = vld [vmem:[#allocation3 + $0x10] sm:$0xff]
        %v582 = vld [vmem:[#allocation3 + $0x18] sm:$0xff]
        %v583 = vld [vmem:[#allocation3 + $0x20] sm:$0xff]
        %v584 = vld [vmem:[#allocation3 + $0x28] sm:$0xff]
        %v585 = vld [vmem:[#allocation3 + $0x30] sm:$0xff]
        %v586 = vld [vmem:[#allocation3 + $0x38] sm:$0xff]
        %v587 = vld [vmem:[#allocation3 + $0x40] sm:$0xff]
        %v588 = vld [vmem:[#allocation3 + $0x48] sm:$0xff]
        %v589 = vld [vmem:[#allocation3 + $0x50] sm:$0xff]
        %v590 = vld [vmem:[#allocation3 + $0x58] sm:$0xff]
        %v591 = vld [vmem:[#allocation3 + $0x60] sm:$0xff]
        %v592 = vld [vmem:[#allocation3 + $0x68] sm:$0xff]
        %v593 = vld [vmem:[#allocation3 + $0x70] sm:$0xff]
        %v594 = vld [vmem:[#allocation3 + $0x78] sm:$0xff]
        %595 = vxpose.xlu0.b32.start [1/16] %v272, 128
        %596 = vxpose.xlu0.b32.cont [2/16] 0.0, 128
        %597 = vxpose.xlu0.b32.cont [3/16] 0.0, 128
        %598 = vxpose.xlu0.b32.cont [4/16] 0.0, 128
        %599 = vxpose.xlu0.b32.cont [5/16] 0.0, 128
        %600 = vxpose.xlu0.b32.cont [6/16] 0.0, 128
        %601 = vxpose.xlu0.b32.cont [7/16] 0.0, 128
        %602 = vxpose.xlu0.b32.cont [8/16] 0.0, 128
        %603 = vxpose.xlu0.b32.cont [9/16] 0.0, 128
        %604 = vxpose.xlu0.b32.cont [10/16] 0.0, 128
        %605 = vxpose.xlu0.b32.cont [11/16] 0.0, 128
        %606 = vxpose.xlu0.b32.cont [12/16] 0.0, 128
        %607 = vxpose.xlu0.b32.cont [13/16] 0.0, 128
        %608 = vxpose.xlu0.b32.cont [14/16] 0.0, 128
        %609 = vxpose.xlu0.b32.cont [15/16] 0.0, 128
        %610 = vxpose.xlu0.b32.end [16/16] 0.0, 128
        %v611 = vpop.trf.xlu0
        %v612 = vpop.trf.xlu0
        %v613 = vpop.trf.xlu0
        %v614 = vpop.trf.xlu0
        %v615 = vpop.trf.xlu0
        %v616 = vpop.trf.xlu0
        %v617 = vpop.trf.xlu0
        %v618 = vpop.trf.xlu0
        %v619 = vpop.trf.xlu0
        %v620 = vpop.trf.xlu0
        %v621 = vpop.trf.xlu0
        %v622 = vpop.trf.xlu0
        %v623 = vpop.trf.xlu0
        %v624 = vpop.trf.xlu0
        %v625 = vpop.trf.xlu0
        %v626 = vpop.trf.xlu0
        %v628 = vsel %vm353, %v611, 0
        %v631 = vsel %vm353, %v612, 0
        %v634 = vsel %vm353, %v613, 0
        %v637 = vsel %vm353, %v614, 0
        %v640 = vsel %vm353, %v615, 0
        %v643 = vsel %vm353, %v616, 0
        %v646 = vsel %vm353, %v617, 0
        %v649 = vsel %vm353, %v618, 0
        %v652 = vsel %vm353, %v619, 0
        %v655 = vsel %vm353, %v620, 0
        %v658 = vsel %vm353, %v621, 0
        %v661 = vsel %vm353, %v622, 0
        %v664 = vsel %vm353, %v623, 0
        %v667 = vsel %vm353, %v624, 0
        %v670 = vsel %vm353, %v625, 0
        %v673 = vsel %vm353, %v626, 0
        %675 = vmatprep.subr.mxu0 0.0
        %676 = vmatpush1.msra.mxu0 0.0
        %677 = vmatprep.subr.mxu0 0.0
        %678 = vmatpush1.msra.mxu0 0.0
        %679 = vmatprep.subr.mxu0 0.0
        %680 = vmatpush1.msra.mxu0 0.0
        %681 = vmatprep.subr.mxu0 0.0
        %682 = vmatpush1.msra.mxu0 0.0
        %683 = vmatprep.subr.mxu0 0.0
        %684 = vmatpush1.msra.mxu0 0.0
        %685 = vmatprep.subr.mxu0 0.0
        %686 = vmatpush1.msra.mxu0 0.0
        %687 = vmatprep.subr.mxu0 0.0
        %688 = vmatpush1.msra.mxu0 0.0
        %689 = vmatprep.subr.mxu0 0.0
        %690 = vmatpush1.msra.mxu0 0.0
        %691 = vmatprep.subr.mxu0 0.0
        %692 = vmatpush1.msra.mxu0 0.0
        %693 = vmatprep.subr.mxu0 0.0
        %694 = vmatpush1.msra.mxu0 0.0
        %695 = vmatprep.subr.mxu0 0.0
        %696 = vmatpush1.msra.mxu0 0.0
        %697 = vmatprep.subr.mxu0 0.0
        %698 = vmatpush1.msra.mxu0 0.0
        %699 = vmatprep.subr.mxu0 0.0
        %700 = vmatpush1.msra.mxu0 0.0
        %701 = vmatprep.subr.mxu0 0.0
        %702 = vmatpush1.msra.mxu0 0.0
        %703 = vmatprep.subr.mxu0 0.0
        %704 = vmatpush1.msra.mxu0 0.0
        %705 = vmatprep.subr.mxu0 0.0
        %706 = vmatpush1.msra.mxu0 %v281
        %707 = vmatprep.subr.mxu0 0.0
        %708 = vmatpush2.msra.mxu0 0.0
        %709 = vmatprep.subr.mxu0 0.0
        %710 = vmatpush2.msra.mxu0 0.0
        %711 = vmatprep.subr.mxu0 0.0
        %712 = vmatpush2.msra.mxu0 0.0
        %713 = vmatprep.subr.mxu0 0.0
        %714 = vmatpush2.msra.mxu0 0.0
        %715 = vmatprep.subr.mxu0 0.0
        %716 = vmatpush2.msra.mxu0 0.0
        %717 = vmatprep.subr.mxu0 0.0
        %718 = vmatpush2.msra.mxu0 0.0
        %719 = vmatprep.subr.mxu0 0.0
        %720 = vmatpush2.msra.mxu0 0.0
        %721 = vmatprep.subr.mxu0 0.0
        %722 = vmatpush2.msra.mxu0 0.0
        %723 = vmatprep.subr.mxu0 0.0
        %724 = vmatpush2.msra.mxu0 0.0
        %725 = vmatprep.subr.mxu0 0.0
        %726 = vmatpush2.msra.mxu0 0.0
        %727 = vmatprep.subr.mxu0 0.0
        %728 = vmatpush2.msra.mxu0 0.0
        %729 = vmatprep.subr.mxu0 0.0
        %730 = vmatpush2.msra.mxu0 0.0
        %731 = vmatprep.subr.mxu0 0.0
        %732 = vmatpush2.msra.mxu0 0.0
        %733 = vmatprep.subr.mxu0 0.0
        %734 = vmatpush2.msra.mxu0 0.0
        %735 = vmatprep.subr.mxu0 0.0
        %736 = vmatpush2.msra.mxu0 0.0
        %737 = vmatprep.subr.mxu0 0.0
        %738 = vmatpush2.msra.mxu0 0.0
        %739 = vmatprep.mubr.f32.mxu0 0.0
        %740 = vmatmul.mubr.f32.gmra.mxu0 %v628
        %v741 = vpop.f32.mrf.mxu0
        %v742 = vadd.f32 0.0, %v741
        %v743 = vpop.f32.mrf.mxu0
        %744 = vmatprep.mubr.f32.mxu0 0.0
        %745 = vmatmul.mubr.f32.gmra.mxu0 %v631
        %v746 = vpop.f32.mrf.mxu0
        %v747 = vadd.f32 0.0, %v746
        %v748 = vpop.f32.mrf.mxu0
        %749 = vmatprep.mubr.f32.mxu0 0.0
        %750 = vmatmul.mubr.f32.gmra.mxu0 %v634
        %v751 = vpop.f32.mrf.mxu0
        %v752 = vadd.f32 0.0, %v751
        %v753 = vpop.f32.mrf.mxu0
        %754 = vmatprep.mubr.f32.mxu0 0.0
        %755 = vmatmul.mubr.f32.gmra.mxu0 %v637
        %v756 = vpop.f32.mrf.mxu0
        %v757 = vadd.f32 0.0, %v756
        %v758 = vpop.f32.mrf.mxu0
        %759 = vmatprep.mubr.f32.mxu0 0.0
        %760 = vmatmul.mubr.f32.gmra.mxu0 %v640
        %v761 = vpop.f32.mrf.mxu0
        %v762 = vadd.f32 0.0, %v761
        %v763 = vpop.f32.mrf.mxu0
        %764 = vmatprep.mubr.f32.mxu0 0.0
        %765 = vmatmul.mubr.f32.gmra.mxu0 %v643
        %v766 = vpop.f32.mrf.mxu0
        %v767 = vadd.f32 0.0, %v766
        %v768 = vpop.f32.mrf.mxu0
        %769 = vmatprep.mubr.f32.mxu0 0.0
        %770 = vmatmul.mubr.f32.gmra.mxu0 %v646
        %v771 = vpop.f32.mrf.mxu0
        %v772 = vadd.f32 0.0, %v771
        %v773 = vpop.f32.mrf.mxu0
        %774 = vmatprep.mubr.f32.mxu0 0.0
        %775 = vmatmul.mubr.f32.gmra.mxu0 %v649
        %v776 = vpop.f32.mrf.mxu0
        %v777 = vadd.f32 0.0, %v776
        %v778 = vpop.f32.mrf.mxu0
        %779 = vmatprep.mubr.f32.mxu0 0.0
        %780 = vmatmul.mubr.f32.gmra.mxu0 %v652
        %v781 = vpop.f32.mrf.mxu0
        %v782 = vadd.f32 0.0, %v781
        %v783 = vpop.f32.mrf.mxu0
        %784 = vmatprep.mubr.f32.mxu0 0.0
        %785 = vmatmul.mubr.f32.gmra.mxu0 %v655
        %v786 = vpop.f32.mrf.mxu0
        %v787 = vadd.f32 0.0, %v786
        %v788 = vpop.f32.mrf.mxu0
        %789 = vmatprep.mubr.f32.mxu0 0.0
        %790 = vmatmul.mubr.f32.gmra.mxu0 %v658
        %v791 = vpop.f32.mrf.mxu0
        %v792 = vadd.f32 0.0, %v791
        %v793 = vpop.f32.mrf.mxu0
        %794 = vmatprep.mubr.f32.mxu0 0.0
        %795 = vmatmul.mubr.f32.gmra.mxu0 %v661
        %v796 = vpop.f32.mrf.mxu0
        %v797 = vadd.f32 0.0, %v796
        %v798 = vpop.f32.mrf.mxu0
        %799 = vmatprep.mubr.f32.mxu0 0.0
        %800 = vmatmul.mubr.f32.gmra.mxu0 %v664
        %v801 = vpop.f32.mrf.mxu0
        %v802 = vadd.f32 0.0, %v801
        %v803 = vpop.f32.mrf.mxu0
        %804 = vmatprep.mubr.f32.mxu0 0.0
        %805 = vmatmul.mubr.f32.gmra.mxu0 %v667
        %v806 = vpop.f32.mrf.mxu0
        %v807 = vadd.f32 0.0, %v806
        %v808 = vpop.f32.mrf.mxu0
        %809 = vmatprep.mubr.f32.mxu0 0.0
        %810 = vmatmul.mubr.f32.gmra.mxu0 %v670
        %v811 = vpop.f32.mrf.mxu0
        %v812 = vadd.f32 0.0, %v811
        %v813 = vpop.f32.mrf.mxu0
        %814 = vmatprep.mubr.f32.mxu0 0.0
        %815 = vmatmul.mubr.f32.gmra.mxu0 %v673
        %v816 = vpop.f32.mrf.mxu0
        %v817 = vadd.f32 0.0, %v816
        %v818 = vpop.f32.mrf.mxu0
        %819 = vdwg.mxu0
        %v820 = vadd.f32 %v579, %v742
        %v821 = vadd.f32 %v580, %v747
        %v822 = vadd.f32 %v581, %v752
        %v823 = vadd.f32 %v582, %v757
        %v824 = vadd.f32 %v583, %v762
        %v825 = vadd.f32 %v584, %v767
        %v826 = vadd.f32 %v585, %v772
        %v827 = vadd.f32 %v586, %v777
        %v828 = vadd.f32 %v587, %v782
        %v829 = vadd.f32 %v588, %v787
        %v830 = vadd.f32 %v589, %v792
        %v831 = vadd.f32 %v590, %v797
        %v832 = vadd.f32 %v591, %v802
        %v833 = vadd.f32 %v592, %v807
        %v834 = vadd.f32 %v593, %v812
        %v835 = vadd.f32 %v594, %v817
        %836 = vst [vmem:[#allocation3] sm:$0xff] %v820
        %837 = vst [vmem:[#allocation3 + $0x8] sm:$0xff] %v821
        %838 = vst [vmem:[#allocation3 + $0x10] sm:$0xff] %v822
        %839 = vst [vmem:[#allocation3 + $0x18] sm:$0xff] %v823
        %840 = vst [vmem:[#allocation3 + $0x20] sm:$0xff] %v824
        %841 = vst [vmem:[#allocation3 + $0x28] sm:$0xff] %v825
        %842 = vst [vmem:[#allocation3 + $0x30] sm:$0xff] %v826
        %843 = vst [vmem:[#allocation3 + $0x38] sm:$0xff] %v827
        %844 = vst [vmem:[#allocation3 + $0x40] sm:$0xff] %v828
        %845 = vst [vmem:[#allocation3 + $0x48] sm:$0xff] %v829
        %846 = vst [vmem:[#allocation3 + $0x50] sm:$0xff] %v830
        %847 = vst [vmem:[#allocation3 + $0x58] sm:$0xff] %v831
        %848 = vst [vmem:[#allocation3 + $0x60] sm:$0xff] %v832
        %849 = vst [vmem:[#allocation3 + $0x68] sm:$0xff] %v833
        %850 = vst [vmem:[#allocation3 + $0x70] sm:$0xff] %v834
        %851 = vst [vmem:[#allocation3 + $0x78] sm:$0xff] %v835
        %p852 = scmp.eq.s32.totalorder %s18, 2
        // Predicated region
        $region41: #{tpu_custom_call.1} parent=31 // pred_check
          %p853 = pneg %p852
        $region42: #{tpu_custom_call.1} parent=31 // pred_check_branch
          %855 = sbr.rel (%p853) target = $region44
        $region43: #{tpu_custom_call.1} parent=31 // pred_region
          %v856 = vld [vmem:[#allocation2] sm:$0xff]
          %v857 = vld [vmem:[#allocation2 + $0x8] sm:$0xff]
          %v858 = vld [vmem:[#allocation2 + $0x10] sm:$0xff]
          %v859 = vld [vmem:[#allocation2 + $0x18] sm:$0xff]
          %v860 = vld [vmem:[#allocation2 + $0x20] sm:$0xff]
          %v861 = vld [vmem:[#allocation2 + $0x28] sm:$0xff]
          %v862 = vld [vmem:[#allocation2 + $0x30] sm:$0xff]
          %v863 = vld [vmem:[#allocation2 + $0x38] sm:$0xff]
          %v864 = vld [vmem:[#allocation2 + $0x40] sm:$0xff]
          %v865 = vld [vmem:[#allocation2 + $0x48] sm:$0xff]
          %v866 = vld [vmem:[#allocation2 + $0x50] sm:$0xff]
          %v867 = vld [vmem:[#allocation2 + $0x58] sm:$0xff]
          %v868 = vld [vmem:[#allocation2 + $0x60] sm:$0xff]
          %v869 = vld [vmem:[#allocation2 + $0x68] sm:$0xff]
          %v870 = vld [vmem:[#allocation2 + $0x70] sm:$0xff]
          %v871 = vld [vmem:[#allocation2 + $0x78] sm:$0xff]
          %v872 = vld [vmem:[#allocation3] sm:$0xff]
          %v873 = vld [vmem:[#allocation3 + $0x8] sm:$0xff]
          %v874 = vld [vmem:[#allocation3 + $0x10] sm:$0xff]
          %v875 = vld [vmem:[#allocation3 + $0x18] sm:$0xff]
          %v876 = vld [vmem:[#allocation3 + $0x20] sm:$0xff]
          %v877 = vld [vmem:[#allocation3 + $0x28] sm:$0xff]
          %v878 = vld [vmem:[#allocation3 + $0x30] sm:$0xff]
          %v879 = vld [vmem:[#allocation3 + $0x38] sm:$0xff]
          %v880 = vld [vmem:[#allocation3 + $0x40] sm:$0xff]
          %v881 = vld [vmem:[#allocation3 + $0x48] sm:$0xff]
          %v882 = vld [vmem:[#allocation3 + $0x50] sm:$0xff]
          %v883 = vld [vmem:[#allocation3 + $0x58] sm:$0xff]
          %v884 = vld [vmem:[#allocation3 + $0x60] sm:$0xff]
          %v885 = vld [vmem:[#allocation3 + $0x68] sm:$0xff]
          %v886 = vld [vmem:[#allocation3 + $0x70] sm:$0xff]
          %v887 = vld [vmem:[#allocation3 + $0x78] sm:$0xff]
          %v888 = vld [vmem:[#allocation5] sm:$0x1]
          %vm889 = vcmask 1040384
          %v890 = vsel %vm889, %v888, 0.0
          %891 = vadd.xlane.f32.xlu0 %v890
          %v892 = vpop.xlane.xlu0 %891
          %v893 = vrot.slane %v892, 4
          %v894 = vadd.f32 %v892, %v893
          %v895 = vrot.slane %v894, 2
          %v896 = vadd.f32 %v894, %v895
          %v897 = vrot.slane %v896, 1
          %v898 = vadd.f32 %v896, %v897
          %s899 = vtos %v898
          %v900 = vld [vmem:[#allocation4] sm:$0x1]
          %v901 = vsel %vm889, %v900, 0.0
          %902 = vadd.xlane.f32.xlu0 %v901
          %v903 = vpop.xlane.xlu0 %902
          %v904 = vrot.slane %v903, 4
          %v905 = vadd.f32 %v903, %v904
          %v906 = vrot.slane %v905, 2
          %v907 = vadd.f32 %v905, %v906
          %v908 = vrot.slane %v907, 1
          %v909 = vadd.f32 %v907, %v908
          %s910 = vtos %v909
          %s911 = ssub.f32 %s899, %s910
          %v912 = vrcp.pop 20.0
          %s913 = vtos %v912
          %s914 = smul.f32 %s911, %s913
          %s915 = scalar_lea.smem [#allocation10], 1
          %916 = sst [smem:[%s915]] %s914
          %v917 = vadd.s32 %v253, 8
          %v918 = vadd.s32 %v253, 16
          %v919 = vadd.s32 %v253, 24
          %v920 = vadd.s32 %v253, 32
          %v921 = vadd.s32 %v253, 40
          %v922 = vadd.s32 %v253, 48
          %v923 = vadd.s32 %v253, 56
          %v924 = vadd.s32 %v253, 64
          %v925 = vadd.s32 %v253, 72
          %v926 = vadd.s32 %v253, 80
          %v927 = vadd.s32 %v253, 88
          %v928 = vadd.s32 %v253, 96
          %v929 = vadd.s32 %v253, 104
          %v930 = vadd.s32 %v253, 112
          %v931 = vadd.s32 %v253, 120
          %vm932 = vcmp.eq.s32.totalorder %v253, %v251
          %vm933 = vcmp.eq.s32.totalorder %v917, %v251
          %vm934 = vcmp.eq.s32.totalorder %v918, %v251
          %vm935 = vcmp.eq.s32.totalorder %v919, %v251
          %vm936 = vcmp.eq.s32.totalorder %v920, %v251
          %vm937 = vcmp.eq.s32.totalorder %v921, %v251
          %vm938 = vcmp.eq.s32.totalorder %v922, %v251
          %vm939 = vcmp.eq.s32.totalorder %v923, %v251
          %vm940 = vcmp.eq.s32.totalorder %v924, %v251
          %vm941 = vcmp.eq.s32.totalorder %v925, %v251
          %vm942 = vcmp.eq.s32.totalorder %v926, %v251
          %vm943 = vcmp.eq.s32.totalorder %v927, %v251
          %vm944 = vcmp.eq.s32.totalorder %v928, %v251
          %vm945 = vcmp.eq.s32.totalorder %v929, %v251
          %vm946 = vcmp.eq.s32.totalorder %v930, %v251
          %vm947 = vcmp.eq.s32.totalorder %v931, %v251
          %v948 = vsel %vm932, %v872, 0.0
          %v949 = vsel %vm933, %v873, 0.0
          %v950 = vsel %vm934, %v874, 0.0
          %v951 = vsel %vm935, %v875, 0.0
          %v952 = vsel %vm936, %v876, 0.0
          %v953 = vsel %vm937, %v877, 0.0
          %v954 = vsel %vm938, %v878, 0.0
          %v955 = vsel %vm939, %v879, 0.0
          %v956 = vsel %vm940, %v880, 0.0
          %v957 = vsel %vm941, %v881, 0.0
          %v958 = vsel %vm942, %v882, 0.0
          %v959 = vsel %vm943, %v883, 0.0
          %v960 = vsel %vm944, %v884, 0.0
          %v961 = vsel %vm945, %v885, 0.0
          %v962 = vsel %vm946, %v886, 0.0
          %v963 = vsel %vm947, %v887, 0.0
          %v964 = vadd.f32 %v948, %v949
          %v965 = vadd.f32 %v964, %v950
          %v966 = vadd.f32 %v965, %v951
          %v967 = vadd.f32 %v966, %v952
          %v968 = vadd.f32 %v967, %v953
          %v969 = vadd.f32 %v968, %v954
          %v970 = vadd.f32 %v969, %v955
          %v971 = vadd.f32 %v970, %v956
          %v972 = vadd.f32 %v971, %v957
          %v973 = vadd.f32 %v972, %v958
          %v974 = vadd.f32 %v973, %v959
          %v975 = vadd.f32 %v974, %v960
          %v976 = vadd.f32 %v975, %v961
          %v977 = vadd.f32 %v976, %v962
          %v978 = vadd.f32 %v977, %v963
          %979 = vadd.xlane.f32.xlu0 %v978
          %v980 = vpop.xlane.xlu0 %979
          %v981 = vrot.slane %v980, 4
          %v982 = vadd.f32 %v980, %v981
          %v983 = vrot.slane %v982, 2
          %v984 = vadd.f32 %v982, %v983
          %v985 = vrot.slane %v984, 1
          %v986 = vadd.f32 %v984, %v985
          %s987 = vtos %v986
          %s988 = ssub.f32 0.0, %s987
          %v989 = vrcp.pop 20.0
          %s990 = vtos %v989
          %s991 = smul.f32 %s988, %s990
          %s992 = scalar_lea.smem [#allocation10], 0
          %993 = sst [smem:[%s992]] %s991
          %v994 = vadd.f32 %v856, %v857
          %v995 = vadd.f32 %v994, %v858
          %v996 = vadd.f32 %v995, %v859
          %v997 = vadd.f32 %v996, %v860
          %v998 = vadd.f32 %v997, %v861
          %v999 = vadd.f32 %v998, %v862
          %v1000 = vadd.f32 %v999, %v863
          %v1001 = vadd.f32 %v1000, %v864
          %v1002 = vadd.f32 %v1001, %v865
          %v1003 = vadd.f32 %v1002, %v866
          %v1004 = vadd.f32 %v1003, %v867
          %v1005 = vadd.f32 %v1004, %v868
          %v1006 = vadd.f32 %v1005, %v869
          %v1007 = vadd.f32 %v1006, %v870
          %v1008 = vadd.f32 %v1007, %v871
          %v1009 = vrot.slane %v1008, 4
          %v1010 = vadd.f32 %v1008, %v1009
          %v1011 = vrot.slane %v1010, 2
          %v1012 = vadd.f32 %v1010, %v1011
          %v1013 = vrot.slane %v1012, 1
          %v1014 = vadd.f32 %v1012, %v1013
          %s1015 = smul.f32 %s899, 20.0
          %v1016 = vmul.f32 %v1014, %v888
          %v1017 = vsel %vm889, %v1016, 0.0
          %1018 = vadd.xlane.f32.xlu0 %v1017
          %v1019 = vpop.xlane.xlu0 %1018
          %v1020 = vrot.slane %v1019, 4
          %v1021 = vadd.f32 %v1019, %v1020
          %v1022 = vrot.slane %v1021, 2
          %v1023 = vadd.f32 %v1021, %v1022
          %v1024 = vrot.slane %v1023, 1
          %v1025 = vadd.f32 %v1023, %v1024
          %s1026 = vtos %v1025
          %s1027 = ssub.f32 %s1015, %s1026
          %1028 = vadd.xlane.f32.xlu0 %v856
          %v1029 = vpop.xlane.xlu0 %1028
          %1030 = vadd.xlane.f32.xlu0 %v857
          %v1031 = vpop.xlane.xlu0 %1030
          %1032 = vadd.xlane.f32.xlu0 %v858
          %v1033 = vpop.xlane.xlu0 %1032
          %1034 = vadd.xlane.f32.xlu0 %v859
          %v1035 = vpop.xlane.xlu0 %1034
          %1036 = vadd.xlane.f32.xlu0 %v860
          %v1037 = vpop.xlane.xlu0 %1036
          %1038 = vadd.xlane.f32.xlu0 %v861
          %v1039 = vpop.xlane.xlu0 %1038
          %1040 = vadd.xlane.f32.xlu0 %v862
          %v1041 = vpop.xlane.xlu0 %1040
          %1042 = vadd.xlane.f32.xlu0 %v863
          %v1043 = vpop.xlane.xlu0 %1042
          %1044 = vadd.xlane.f32.xlu0 %v864
          %v1045 = vpop.xlane.xlu0 %1044
          %1046 = vadd.xlane.f32.xlu0 %v865
          %v1047 = vpop.xlane.xlu0 %1046
          %1048 = vadd.xlane.f32.xlu0 %v866
          %v1049 = vpop.xlane.xlu0 %1048
          %1050 = vadd.xlane.f32.xlu0 %v867
          %v1051 = vpop.xlane.xlu0 %1050
          %1052 = vadd.xlane.f32.xlu0 %v868
          %v1053 = vpop.xlane.xlu0 %1052
          %1054 = vadd.xlane.f32.xlu0 %v869
          %v1055 = vpop.xlane.xlu0 %1054
          %1056 = vadd.xlane.f32.xlu0 %v870
          %v1057 = vpop.xlane.xlu0 %1056
          %1058 = vadd.xlane.f32.xlu0 %v871
          %v1059 = vpop.xlane.xlu0 %1058
          %1060 = vadd.xlane.f32.xlu0 %v872
          %v1061 = vpop.xlane.xlu0 %1060
          %1062 = vadd.xlane.f32.xlu0 %v873
          %v1063 = vpop.xlane.xlu0 %1062
          %1064 = vadd.xlane.f32.xlu0 %v874
          %v1065 = vpop.xlane.xlu0 %1064
          %1066 = vadd.xlane.f32.xlu0 %v875
          %v1067 = vpop.xlane.xlu0 %1066
          %1068 = vadd.xlane.f32.xlu0 %v876
          %v1069 = vpop.xlane.xlu0 %1068
          %1070 = vadd.xlane.f32.xlu0 %v877
          %v1071 = vpop.xlane.xlu0 %1070
          %1072 = vadd.xlane.f32.xlu0 %v878
          %v1073 = vpop.xlane.xlu0 %1072
          %1074 = vadd.xlane.f32.xlu0 %v879
          %v1075 = vpop.xlane.xlu0 %1074
          %1076 = vadd.xlane.f32.xlu0 %v880
          %v1077 = vpop.xlane.xlu0 %1076
          %1078 = vadd.xlane.f32.xlu0 %v881
          %v1079 = vpop.xlane.xlu0 %1078
          %1080 = vadd.xlane.f32.xlu0 %v882
          %v1081 = vpop.xlane.xlu0 %1080
          %1082 = vadd.xlane.f32.xlu0 %v883
          %v1083 = vpop.xlane.xlu0 %1082
          %1084 = vadd.xlane.f32.xlu0 %v884
          %v1085 = vpop.xlane.xlu0 %1084
          %1086 = vadd.xlane.f32.xlu0 %v885
          %v1087 = vpop.xlane.xlu0 %1086
          %1088 = vadd.xlane.f32.xlu0 %v886
          %v1089 = vpop.xlane.xlu0 %1088
          %1090 = vadd.xlane.f32.xlu0 %v887
          %v1091 = vpop.xlane.xlu0 %1090
          %v1092 = vmul.f32 %v1029, %v1061
          %v1093 = vmul.f32 %v1031, %v1063
          %v1094 = vmul.f32 %v1033, %v1065
          %v1095 = vmul.f32 %v1035, %v1067
          %v1096 = vmul.f32 %v1037, %v1069
          %v1097 = vmul.f32 %v1039, %v1071
          %v1098 = vmul.f32 %v1041, %v1073
          %v1099 = vmul.f32 %v1043, %v1075
          %v1100 = vmul.f32 %v1045, %v1077
          %v1101 = vmul.f32 %v1047, %v1079
          %v1102 = vmul.f32 %v1049, %v1081
          %v1103 = vmul.f32 %v1051, %v1083
          %v1104 = vmul.f32 %v1053, %v1085
          %v1105 = vmul.f32 %v1055, %v1087
          %v1106 = vmul.f32 %v1057, %v1089
          %v1107 = vmul.f32 %v1059, %v1091
          %vm1108 = vcmask 7168
          %v1109 = vsel %vm1108, %v1092, 0.0
          %v1110 = vsel %vm1108, %v1093, 0.0
          %v1111 = vadd.f32 %v1109, %v1110
          %v1112 = vsel %vm1108, %v1094, 0.0
          %v1113 = vadd.f32 %v1111, %v1112
          %v1114 = vsel %vm1108, %v1095, 0.0
          %v1115 = vadd.f32 %v1113, %v1114
          %v1116 = vsel %vm1108, %v1096, 0.0
          %v1117 = vadd.f32 %v1115, %v1116
          %v1118 = vsel %vm1108, %v1097, 0.0
          %v1119 = vadd.f32 %v1117, %v1118
          %v1120 = vsel %vm1108, %v1098, 0.0
          %v1121 = vadd.f32 %v1119, %v1120
          %v1122 = vsel %vm1108, %v1099, 0.0
          %v1123 = vadd.f32 %v1121, %v1122
          %v1124 = vsel %vm1108, %v1100, 0.0
          %v1125 = vadd.f32 %v1123, %v1124
          %v1126 = vsel %vm1108, %v1101, 0.0
          %v1127 = vadd.f32 %v1125, %v1126
          %v1128 = vsel %vm1108, %v1102, 0.0
          %v1129 = vadd.f32 %v1127, %v1128
          %v1130 = vsel %vm1108, %v1103, 0.0
          %v1131 = vadd.f32 %v1129, %v1130
          %v1132 = vsel %vm1108, %v1104, 0.0
          %v1133 = vadd.f32 %v1131, %v1132
          %v1134 = vsel %vm1108, %v1105, 0.0
          %v1135 = vadd.f32 %v1133, %v1134
          %v1136 = vsel %vm1108, %v1106, 0.0
          %v1137 = vadd.f32 %v1135, %v1136
          %v1138 = vsel %vm1108, %v1107, 0.0
          %v1139 = vadd.f32 %v1137, %v1138
          %1140 = vadd.xlane.f32.xlu0 %v1139
          %v1141 = vpop.xlane.xlu0 %1140
          %v1142 = vrot.slane %v1141, 4
          %v1143 = vadd.f32 %v1141, %v1142
          %v1144 = vrot.slane %v1143, 2
          %v1145 = vadd.f32 %v1143, %v1144
          %v1146 = vrot.slane %v1145, 1
          %v1147 = vadd.f32 %v1145, %v1146
          %s1148 = vtos %v1147
          %v1149 = vmul.f32 %v856, %v872
          %v1150 = vmul.f32 %v857, %v873
          %v1151 = vmul.f32 %v858, %v874
          %v1152 = vmul.f32 %v859, %v875
          %v1153 = vmul.f32 %v860, %v876
          %v1154 = vmul.f32 %v861, %v877
          %v1155 = vmul.f32 %v862, %v878
          %v1156 = vmul.f32 %v863, %v879
          %v1157 = vmul.f32 %v864, %v880
          %v1158 = vmul.f32 %v865, %v881
          %v1159 = vmul.f32 %v866, %v882
          %v1160 = vmul.f32 %v867, %v883
          %v1161 = vmul.f32 %v868, %v884
          %v1162 = vmul.f32 %v869, %v885
          %v1163 = vmul.f32 %v870, %v886
          %v1164 = vmul.f32 %v871, %v887
          %v1165 = vadd.f32 %v1149, %v1150
          %v1166 = vadd.f32 %v1165, %v1151
          %v1167 = vadd.f32 %v1166, %v1152
          %v1168 = vadd.f32 %v1167, %v1153
          %v1169 = vadd.f32 %v1168, %v1154
          %v1170 = vadd.f32 %v1169, %v1155
          %v1171 = vadd.f32 %v1170, %v1156
          %v1172 = vadd.f32 %v1171, %v1157
          %v1173 = vadd.f32 %v1172, %v1158
          %v1174 = vadd.f32 %v1173, %v1159
          %v1175 = vadd.f32 %v1174, %v1160
          %v1176 = vadd.f32 %v1175, %v1161
          %v1177 = vadd.f32 %v1176, %v1162
          %v1178 = vadd.f32 %v1177, %v1163
          %v1179 = vadd.f32 %v1178, %v1164
          %1180 = vadd.xlane.f32.xlu0 %v1179
          %v1181 = vpop.xlane.xlu0 %1180
          %v1182 = vrot.slane %v1181, 4
          %v1183 = vadd.f32 %v1181, %v1182
          %v1184 = vrot.slane %v1183, 2
          %v1185 = vadd.f32 %v1183, %v1184
          %v1186 = vrot.slane %v1185, 1
          %v1187 = vadd.f32 %v1185, %v1186
          %s1188 = vtos %v1187
          %s1189 = ssub.f32 %s1148, %s1188
          %s1190 = ssub.f32 %s1027, %s1189
          %v1191 = vrcp.pop 400.0
          %s1192 = vtos %v1191
          %s1193 = smul.f32 %s1190, %s1192
          %s1194 = scalar_lea.smem [#allocation10], 2
          %1195 = sst [smem:[%s1194]] %s1193
        $region44: #{tpu_custom_call.1} parent=31 // pred_fallthru
          _
        // Predicated region
        $region45: #{tpu_custom_call.1} parent=31 // pred_check
          %p1196 = pneg %p109
        $region46: #{tpu_custom_call.1} parent=31 // pred_check_branch
          %1198 = sbr.rel (%p1196) target = $region48
        $region47: #{tpu_custom_call.1} parent=31 // pred_region
          %s1200 = ssub.s32 16, 16
          %1201 = vsyncadd [#allocation9], %s1200
          %1204 = dma.smem_to_hbm [#allocation10], 16, %s3, [#allocation9]
        $region48: #{tpu_custom_call.1} parent=31 // pred_fallthru
          _
        // Predicated region
        $region49: #{tpu_custom_call.1} parent=31 // pred_check
          %p1205 = pneg %p109
        $region50: #{tpu_custom_call.1} parent=31 // pred_check_branch
          %1207 = sbr.rel (%p1205) target = $region52
        $region51: #{tpu_custom_call.1} parent=31 // pred_region
          %1208 = dma.done [#allocation9], 16
        $region52: #{tpu_custom_call.1} parent=31 // pred_fallthru
          _
        %1209 = sfence
      $region32: #{tpu_custom_call.1} parent=5 // pred_fallthru
        _
      %p1210 = scmp.le.s32.totalorder 2, %s13
      // Predicated region
      $region53: #{tpu_custom_call.1} parent=5 // pred_check
        %p1211 = pneg %p1210
      $region54: #{tpu_custom_call.1} parent=5 // pred_check_branch
        %1213 = sbr.rel (%p1211) target = $region56
      $region55: #{tpu_custom_call.1} parent=5 // pred_region
        %s1214 = ssub.s32 %s13, 2
      $region56: #{tpu_custom_call.1} parent=5 // pred_fallthru
        _
    $region6: #{tpu_custom_call.1} parent=1 // loop_footer
      %s17 = sadd.s32 1, %s13
    $region7: #{tpu_custom_call.1} parent=1 // loop_footer_branch
      %12 = sbr.rel target = $region3
    $region8: #{tpu_custom_call.1} parent=1 // loop_exit
      _
    %1215 = vsyncpa [#allocation8], 1
    %s1216 = scalar_lea.sflag [#allocation8], 1
    %1217 = vsyncpa %s1216, 1
    %1218 = vsyncpa [#allocation9], 1
    %s1219 = scalar_lea.sflag [#allocation9], 1
    %1220 = vsyncpa %s1219, 1

</llo_original>
